<compile_context>
chip_gen: v7x
topology: tpu7x:2x2x1
jax: 0.10.0
libtpu: 0.0.40
codegen_flags: <defaults>
</compile_context>

<pallas_src>
import functools

import numpy as np
import jax
import jax.numpy as jnp
from jax.experimental import pallas as pl
from jax.experimental.pallas import tpu as pltpu


def _elu(x):
    # torch.nn.ELU(alpha=1.0).  exp(min(x,0))-1 keeps lowering to known-good
    # primitives; absolute error vs expm1 near 0 is ~1 ulp (within tolerance).
    return jnp.where(x > 0, x, jnp.exp(jnp.minimum(x, 0.0)) - 1.0)


# ---------------------------------------------------------------------------
# Fused kernel: antibody inception + virus inception + MLP head
# ---------------------------------------------------------------------------
def _textcnn_kernel(ab_ref, vi_ref, kab_ref, bab_ref, kvi_ref, bvi_ref,
                    w1_ref, b1_ref, w2_ref, b2_ref, out_ref,
                    *, batch, amino, wout_ab, wout_vi):
    """Whole-batch TextCNN forward in one kernel invocation."""

    def inception(x_ref, k_ref, bias_ref, w_out):
        k = k_ref[...]                      # (A*A, 3A) packed conv-as-matmul W
        # im2col for the WHOLE batch: rows = (b, w) flattened, cols = (j, a).
        rows = []
        for b in range(batch):              # batch is small & static
            x = x_ref[b]                    # (Lp, A): padded seq x amino lanes
            rows.append(jnp.concatenate(
                [x[j:j + w_out, :] for j in range(amino)], axis=1))
        patches = jnp.concatenate(rows, axis=0)          # (B*w_out, A*A)
        # One MXU matmul for all samples & all three conv branches.
        conv = jnp.dot(patches, k, preferred_element_type=jnp.float32)
        # Per-sample max over sequence positions.
        feats = [jnp.max(conv[b * w_out:(b + 1) * w_out, :],
                         axis=0, keepdims=True) for b in range(batch)]
        ft = jnp.concatenate(feats, axis=0)               # (B, 3A)
        # ReLU is monotone: max_w relu(conv+b) == relu(max_w conv + b).
        return jnp.maximum(ft + bias_ref[...], 0.0)

    ab_ft = inception(ab_ref, kab_ref, bab_ref, wout_ab)
    vi_ft = inception(vi_ref, kvi_ref, bvi_ref, wout_vi)
    pair = jnp.concatenate([vi_ft, ab_ft], axis=1)        # [virus, antibody]
    x = _elu(pair)
    h = _elu(jnp.dot(x, w1_ref[...], preferred_element_type=jnp.float32)
             + b1_ref[...])
    # (h_dim, 1) projection as a VPU lane reduction (avoid an N=1 matmul).
    logits = jnp.sum(h * w2_ref[...], axis=1, keepdims=True) + b2_ref[...]
    out_ref[...] = jax.nn.sigmoid(logits)


# ---------------------------------------------------------------------------
# Wrapper: pack conv kernels into a matmul weight matrix and call the kernel
# ---------------------------------------------------------------------------
def _pack_conv_weights(w5, w7, w9, A):
    """Pack the (5,A)/(7,A)/(9,A) conv kernels into one (A*A, 3A) matrix K so
    that patches(B*W_out, A*A) @ K reproduces all three 'same'-padded convs.
    Rows are indexed (j = weight seq-column, a = input amino); the amino-dim
    zero padding of the convs is folded into zero entries of K.  Output
    columns are ordered (branch, amino) to match torch.cat([ft1, ft2, ft3])."""

    def centered(w, kh):                      # center kh rows inside 9
        top = 4 - kh // 2
        return jnp.pad(w, ((top, 9 - kh - top), (0, 0)))

    wfull = jnp.stack([centered(w5, 5), centered(w7, 7), centered(w9, 9)])  # (3,9,A)
    d = np.arange(A)[:, None] + 4 - np.arange(A)[None, :]    # offset a+4-h
    valid = (d >= 0) & (d < 9)
    gathered = wfull[:, np.clip(d, 0, 8), :]                  # (3, A_a, A_h, A_j)
    gathered = jnp.where(valid[None, :, :, None], gathered, 0.0)
    # rows: j*A + a    cols: branch*A + h
    return jnp.transpose(gathered, (3, 1, 0, 2)).reshape(A * A, 3 * A)


@jax.jit
def textcnn_forward(params, antibody_oh, virus_oh):
    B, L_ab, A = antibody_oh.shape
    _, L_vi, _ = virus_oh.shape
    pw = A // 2
    wout_ab = L_ab + 2 * pw - A + 1
    wout_vi = L_vi + 2 * pw - A + 1

    # Sequence-dim zero padding only (amino padding lives in the packed K).
    ab_pad = jnp.pad(antibody_oh, ((0, 0), (pw, pw), (0, 0)))
    vi_pad = jnp.pad(virus_oh, ((0, 0), (pw, pw), (0, 0)))

    k_ab = _pack_conv_weights(params["ab_w5"], params["ab_w7"], params["ab_w9"], A)
    k_vi = _pack_conv_weights(params["vi_w5"], params["vi_w7"], params["vi_w9"], A)
    b_ab = jnp.repeat(params["ab_b"], A)[None, :]             # (1, 3A)
    b_vi = jnp.repeat(params["vi_b"], A)[None, :]

    kernel = functools.partial(_textcnn_kernel, batch=B, amino=A,
                               wout_ab=wout_ab, wout_vi=wout_vi)
    vmem = pl.BlockSpec(memory_space=pltpu.MemorySpace.VMEM)
    return pl.pallas_call(
        kernel,
        out_shape=jax.ShapeDtypeStruct((B, 1), jnp.float32),
        in_specs=[vmem] * 10,
        out_specs=vmem,
    )(ab_pad, vi_pad, k_ab, b_ab, k_vi, b_vi,
      params["w1"], params["b1"], params["w2"].reshape(1, -1), params["b2"])


# ---------------------------------------------------------------------------
# Pure-JAX reference (mirrors the PyTorch forward) for a correctness check.
# ---------------------------------------------------------------------------
def _inception_ref(x, w5, w7, w9, biases):
    B, L, A = x.shape
    xt = jnp.transpose(x, (0, 2, 1))[:, None, :, :]  # NCHW: (B, 1, A, L)

    def one(w, b, kh):
        y = jax.lax.conv_general_dilated(
            xt, w[None, None, :, :], window_strides=(1, 1),
            padding=[(kh // 2, kh // 2), (A // 2, A // 2)],
            dimension_numbers=("NCHW", "OIHW", "NCHW"))
        y = jax.nn.relu(y + b)
        return jnp.max(y, axis=-1).reshape(B, -1)

    return jnp.concatenate(
        [one(w5, biases[0], 5), one(w7, biases[1], 7), one(w9, biases[2], 9)],
        axis=1)


def _forward_ref(params, antibody_oh, virus_oh):
    ab = _inception_ref(antibody_oh, params["ab_w5"], params["ab_w7"],
                        params["ab_w9"], params["ab_b"])
    vi = _inception_ref(virus_oh, params["vi_w5"], params["vi_w7"],
                        params["vi_w9"], params["vi_b"])
    pair = jnp.concatenate([vi, ab], axis=-1)
    x = jax.nn.elu(pair)
    h = jax.nn.elu(x @ params["w1"] + params["b1"])
    return jax.nn.sigmoid(h @ params["w2"] + params["b2"])


def init_params(key, A, h_dim):
    ks = jax.random.split(key, 12)

    def nrm(k, shape, scale):
        return (scale * jax.random.normal(k, shape)).astype(jnp.float32)

    return {
        "ab_w5": nrm(ks[0], (5, A), 0.1), "ab_w7": nrm(ks[1], (7, A), 0.1),
        "ab_w9": nrm(ks[2], (9, A), 0.1), "ab_b": nrm(ks[3], (3,), 0.1),
        "vi_w5": nrm(ks[4], (5, A), 0.1), "vi_w7": nrm(ks[5], (7, A), 0.1),
        "vi_w9": nrm(ks[6], (9, A), 0.1), "vi_b": nrm(ks[7], (3,), 0.1),
        "w1": nrm(ks[8], (6 * A, h_dim), 0.05), "b1": nrm(ks[9], (1, h_dim), 0.05),
        "w2": nrm(ks[10], (h_dim, 1), 0.05), "b2": nrm(ks[11], (1, 1), 0.05),
    }


if __name__ == "__main__":
    B, A, L_ab, L_vi, H = 2, 16, 32, 24, 32  # batch, amino_ft_dim, lens, h_dim
    key = jax.random.PRNGKey(0)
    kp, ka, kv = jax.random.split(key, 3)
    params = init_params(kp, A, H)

    # TODO(synk): seq_pad_clip / to_onehot are host-side string/list
    # preprocessing in the original module; one-hot float inputs built directly.
    ab_tok = jax.random.randint(ka, (B, L_ab), 0, A)
    vi_tok = jax.random.randint(kv, (B, L_vi), 0, A)
    ab_oh = jax.nn.one_hot(ab_tok, A, dtype=jnp.float32)
    vi_oh = jax.nn.one_hot(vi_tok, A, dtype=jnp.float32)

    out = jax.block_until_ready(textcnn_forward(params, ab_oh, vi_oh))
    ref = jax.block_until_ready(_forward_ref(params, ab_oh, vi_oh))
    np.testing.assert_allclose(np.asarray(out), np.asarray(ref),
                               rtol=1e-4, atol=1e-5)
    print("KERNEL_OK")
</pallas_src>

<mosaic_0001>
module attributes {stable_mosaic.version = 11 : i64} {
  func.func @_textcnn_kernel(%arg0: memref<2x48x16xf32, #tpu.memory_space<vmem>>, %arg1: memref<2x40x16xf32, #tpu.memory_space<vmem>>, %arg2: memref<256x48xf32, #tpu.memory_space<vmem>>, %arg3: memref<1x48xf32, #tpu.memory_space<vmem>>, %arg4: memref<256x48xf32, #tpu.memory_space<vmem>>, %arg5: memref<1x48xf32, #tpu.memory_space<vmem>>, %arg6: memref<96x32xf32, #tpu.memory_space<vmem>>, %arg7: memref<1x32xf32, #tpu.memory_space<vmem>>, %arg8: memref<1x32xf32, #tpu.memory_space<vmem>>, %arg9: memref<1x1xf32, #tpu.memory_space<vmem>>, %arg10: memref<2x1xf32, #tpu.memory_space<vmem>>) attributes {dimension_semantics = [], scalar_prefetch = 0 : i64, scratch_operands = 0 : i64, tpu.core_type = #tpu.core_type<tc>} {
    %c0 = arith.constant 0 : index
    %c0_0 = arith.constant 0 : index
    %0 = vector.load %arg2[%c0, %c0_0] : memref<256x48xf32, #tpu.memory_space<vmem>>, vector<256x48xf32>
    %c0_1 = arith.constant 0 : index
    %c0_2 = arith.constant 0 : index
    %c0_3 = arith.constant 0 : index
    %1 = vector.load %arg0[%c0_1, %c0_2, %c0_3] : memref<2x48x16xf32, #tpu.memory_space<vmem>>, vector<1x48x16xf32>
    %2 = vector.shape_cast %1 : vector<1x48x16xf32> to vector<48x16xf32>
    %3 = vector.extract_strided_slice %2 {offsets = [0, 0], sizes = [33, 16], strides = [1, 1]} : vector<48x16xf32> to vector<33x16xf32>
    %4 = vector.extract_strided_slice %2 {offsets = [1, 0], sizes = [33, 16], strides = [1, 1]} : vector<48x16xf32> to vector<33x16xf32>
    %5 = vector.extract_strided_slice %2 {offsets = [2, 0], sizes = [33, 16], strides = [1, 1]} : vector<48x16xf32> to vector<33x16xf32>
    %6 = vector.extract_strided_slice %2 {offsets = [3, 0], sizes = [33, 16], strides = [1, 1]} : vector<48x16xf32> to vector<33x16xf32>
    %7 = vector.extract_strided_slice %2 {offsets = [4, 0], sizes = [33, 16], strides = [1, 1]} : vector<48x16xf32> to vector<33x16xf32>
    %8 = vector.extract_strided_slice %2 {offsets = [5, 0], sizes = [33, 16], strides = [1, 1]} : vector<48x16xf32> to vector<33x16xf32>
    %9 = vector.extract_strided_slice %2 {offsets = [6, 0], sizes = [33, 16], strides = [1, 1]} : vector<48x16xf32> to vector<33x16xf32>
    %10 = vector.extract_strided_slice %2 {offsets = [7, 0], sizes = [33, 16], strides = [1, 1]} : vector<48x16xf32> to vector<33x16xf32>
    %11 = vector.extract_strided_slice %2 {offsets = [8, 0], sizes = [33, 16], strides = [1, 1]} : vector<48x16xf32> to vector<33x16xf32>
    %12 = vector.extract_strided_slice %2 {offsets = [9, 0], sizes = [33, 16], strides = [1, 1]} : vector<48x16xf32> to vector<33x16xf32>
    %13 = vector.extract_strided_slice %2 {offsets = [10, 0], sizes = [33, 16], strides = [1, 1]} : vector<48x16xf32> to vector<33x16xf32>
    %14 = vector.extract_strided_slice %2 {offsets = [11, 0], sizes = [33, 16], strides = [1, 1]} : vector<48x16xf32> to vector<33x16xf32>
    %15 = vector.extract_strided_slice %2 {offsets = [12, 0], sizes = [33, 16], strides = [1, 1]} : vector<48x16xf32> to vector<33x16xf32>
    %16 = vector.extract_strided_slice %2 {offsets = [13, 0], sizes = [33, 16], strides = [1, 1]} : vector<48x16xf32> to vector<33x16xf32>
    %17 = vector.extract_strided_slice %2 {offsets = [14, 0], sizes = [33, 16], strides = [1, 1]} : vector<48x16xf32> to vector<33x16xf32>
    %18 = vector.extract_strided_slice %2 {offsets = [15, 0], sizes = [33, 16], strides = [1, 1]} : vector<48x16xf32> to vector<33x16xf32>
    %19 = tpu.concatenate %3, %4, %5, %6, %7, %8, %9, %10, %11, %12, %13, %14, %15, %16, %17, %18 in 1 : vector<33x16xf32>, vector<33x16xf32>, vector<33x16xf32>, vector<33x16xf32>, vector<33x16xf32>, vector<33x16xf32>, vector<33x16xf32>, vector<33x16xf32>, vector<33x16xf32>, vector<33x16xf32>, vector<33x16xf32>, vector<33x16xf32>, vector<33x16xf32>, vector<33x16xf32>, vector<33x16xf32>, vector<33x16xf32> -> vector<33x256xf32>
    %c1 = arith.constant 1 : index
    %c0_4 = arith.constant 0 : index
    %c0_5 = arith.constant 0 : index
    %20 = vector.load %arg0[%c1, %c0_4, %c0_5] : memref<2x48x16xf32, #tpu.memory_space<vmem>>, vector<1x48x16xf32>
    %21 = vector.shape_cast %20 : vector<1x48x16xf32> to vector<48x16xf32>
    %22 = vector.extract_strided_slice %21 {offsets = [0, 0], sizes = [33, 16], strides = [1, 1]} : vector<48x16xf32> to vector<33x16xf32>
    %23 = vector.extract_strided_slice %21 {offsets = [1, 0], sizes = [33, 16], strides = [1, 1]} : vector<48x16xf32> to vector<33x16xf32>
    %24 = vector.extract_strided_slice %21 {offsets = [2, 0], sizes = [33, 16], strides = [1, 1]} : vector<48x16xf32> to vector<33x16xf32>
    %25 = vector.extract_strided_slice %21 {offsets = [3, 0], sizes = [33, 16], strides = [1, 1]} : vector<48x16xf32> to vector<33x16xf32>
    %26 = vector.extract_strided_slice %21 {offsets = [4, 0], sizes = [33, 16], strides = [1, 1]} : vector<48x16xf32> to vector<33x16xf32>
    %27 = vector.extract_strided_slice %21 {offsets = [5, 0], sizes = [33, 16], strides = [1, 1]} : vector<48x16xf32> to vector<33x16xf32>
    %28 = vector.extract_strided_slice %21 {offsets = [6, 0], sizes = [33, 16], strides = [1, 1]} : vector<48x16xf32> to vector<33x16xf32>
    %29 = vector.extract_strided_slice %21 {offsets = [7, 0], sizes = [33, 16], strides = [1, 1]} : vector<48x16xf32> to vector<33x16xf32>
    %30 = vector.extract_strided_slice %21 {offsets = [8, 0], sizes = [33, 16], strides = [1, 1]} : vector<48x16xf32> to vector<33x16xf32>
    %31 = vector.extract_strided_slice %21 {offsets = [9, 0], sizes = [33, 16], strides = [1, 1]} : vector<48x16xf32> to vector<33x16xf32>
    %32 = vector.extract_strided_slice %21 {offsets = [10, 0], sizes = [33, 16], strides = [1, 1]} : vector<48x16xf32> to vector<33x16xf32>
    %33 = vector.extract_strided_slice %21 {offsets = [11, 0], sizes = [33, 16], strides = [1, 1]} : vector<48x16xf32> to vector<33x16xf32>
    %34 = vector.extract_strided_slice %21 {offsets = [12, 0], sizes = [33, 16], strides = [1, 1]} : vector<48x16xf32> to vector<33x16xf32>
    %35 = vector.extract_strided_slice %21 {offsets = [13, 0], sizes = [33, 16], strides = [1, 1]} : vector<48x16xf32> to vector<33x16xf32>
    %36 = vector.extract_strided_slice %21 {offsets = [14, 0], sizes = [33, 16], strides = [1, 1]} : vector<48x16xf32> to vector<33x16xf32>
    %37 = vector.extract_strided_slice %21 {offsets = [15, 0], sizes = [33, 16], strides = [1, 1]} : vector<48x16xf32> to vector<33x16xf32>
    %38 = tpu.concatenate %22, %23, %24, %25, %26, %27, %28, %29, %30, %31, %32, %33, %34, %35, %36, %37 in 1 : vector<33x16xf32>, vector<33x16xf32>, vector<33x16xf32>, vector<33x16xf32>, vector<33x16xf32>, vector<33x16xf32>, vector<33x16xf32>, vector<33x16xf32>, vector<33x16xf32>, vector<33x16xf32>, vector<33x16xf32>, vector<33x16xf32>, vector<33x16xf32>, vector<33x16xf32>, vector<33x16xf32>, vector<33x16xf32> -> vector<33x256xf32>
    %39 = tpu.concatenate %19, %38 in 0 : vector<33x256xf32>, vector<33x256xf32> -> vector<66x256xf32>
    %cst = arith.constant dense<0.000000e+00> : vector<66x48xf32>
    %40 = tpu.matmul %39, %0, %cst {dimension_numbers = #tpu.dot_dimension_numbers<[1], [0], [0], [1], [0, 0, 1, 1], [], []>} : vector<66x256xf32>, vector<256x48xf32>, vector<66x48xf32> -> vector<66x48xf32>
    %41 = vector.extract_strided_slice %40 {offsets = [0, 0], sizes = [33, 48], strides = [1, 1]} : vector<66x48xf32> to vector<33x48xf32>
    %cst_6 = arith.constant dense<0xFF800000> : vector<48xf32>
    %42 = vector.multi_reduction <maximumf>, %41, %cst_6 [0] : vector<33x48xf32> to vector<48xf32>
    %43 = vector.shape_cast %42 : vector<48xf32> to vector<1x48xf32>
    %44 = vector.extract_strided_slice %40 {offsets = [33, 0], sizes = [33, 48], strides = [1, 1]} : vector<66x48xf32> to vector<33x48xf32>
    %cst_7 = arith.constant dense<0xFF800000> : vector<48xf32>
    %45 = vector.multi_reduction <maximumf>, %44, %cst_7 [0] : vector<33x48xf32> to vector<48xf32>
    %46 = vector.shape_cast %45 : vector<48xf32> to vector<1x48xf32>
    %47 = tpu.concatenate %43, %46 in 0 : vector<1x48xf32>, vector<1x48xf32> -> vector<2x48xf32>
    %c0_8 = arith.constant 0 : index
    %c0_9 = arith.constant 0 : index
    %48 = vector.load %arg3[%c0_8, %c0_9] : memref<1x48xf32, #tpu.memory_space<vmem>>, vector<1x48xf32>
    %49 = vector.broadcast %48 : vector<1x48xf32> to vector<2x48xf32>
    %50 = arith.addf %47, %49 : vector<2x48xf32>
    %cst_10 = arith.constant 0.000000e+00 : f32
    %51 = vector.broadcast %cst_10 : f32 to vector<2x48xf32>
    %52 = arith.maximumf %50, %51 : vector<2x48xf32>
    %c0_11 = arith.constant 0 : index
    %c0_12 = arith.constant 0 : index
    %53 = vector.load %arg4[%c0_11, %c0_12] : memref<256x48xf32, #tpu.memory_space<vmem>>, vector<256x48xf32>
    %c0_13 = arith.constant 0 : index
    %c0_14 = arith.constant 0 : index
    %c0_15 = arith.constant 0 : index
    %54 = vector.load %arg1[%c0_13, %c0_14, %c0_15] : memref<2x40x16xf32, #tpu.memory_space<vmem>>, vector<1x40x16xf32>
    %55 = vector.shape_cast %54 : vector<1x40x16xf32> to vector<40x16xf32>
    %56 = vector.extract_strided_slice %55 {offsets = [0, 0], sizes = [25, 16], strides = [1, 1]} : vector<40x16xf32> to vector<25x16xf32>
    %57 = vector.extract_strided_slice %55 {offsets = [1, 0], sizes = [25, 16], strides = [1, 1]} : vector<40x16xf32> to vector<25x16xf32>
    %58 = vector.extract_strided_slice %55 {offsets = [2, 0], sizes = [25, 16], strides = [1, 1]} : vector<40x16xf32> to vector<25x16xf32>
    %59 = vector.extract_strided_slice %55 {offsets = [3, 0], sizes = [25, 16], strides = [1, 1]} : vector<40x16xf32> to vector<25x16xf32>
    %60 = vector.extract_strided_slice %55 {offsets = [4, 0], sizes = [25, 16], strides = [1, 1]} : vector<40x16xf32> to vector<25x16xf32>
    %61 = vector.extract_strided_slice %55 {offsets = [5, 0], sizes = [25, 16], strides = [1, 1]} : vector<40x16xf32> to vector<25x16xf32>
    %62 = vector.extract_strided_slice %55 {offsets = [6, 0], sizes = [25, 16], strides = [1, 1]} : vector<40x16xf32> to vector<25x16xf32>
    %63 = vector.extract_strided_slice %55 {offsets = [7, 0], sizes = [25, 16], strides = [1, 1]} : vector<40x16xf32> to vector<25x16xf32>
    %64 = vector.extract_strided_slice %55 {offsets = [8, 0], sizes = [25, 16], strides = [1, 1]} : vector<40x16xf32> to vector<25x16xf32>
    %65 = vector.extract_strided_slice %55 {offsets = [9, 0], sizes = [25, 16], strides = [1, 1]} : vector<40x16xf32> to vector<25x16xf32>
    %66 = vector.extract_strided_slice %55 {offsets = [10, 0], sizes = [25, 16], strides = [1, 1]} : vector<40x16xf32> to vector<25x16xf32>
    %67 = vector.extract_strided_slice %55 {offsets = [11, 0], sizes = [25, 16], strides = [1, 1]} : vector<40x16xf32> to vector<25x16xf32>
    %68 = vector.extract_strided_slice %55 {offsets = [12, 0], sizes = [25, 16], strides = [1, 1]} : vector<40x16xf32> to vector<25x16xf32>
    %69 = vector.extract_strided_slice %55 {offsets = [13, 0], sizes = [25, 16], strides = [1, 1]} : vector<40x16xf32> to vector<25x16xf32>
    %70 = vector.extract_strided_slice %55 {offsets = [14, 0], sizes = [25, 16], strides = [1, 1]} : vector<40x16xf32> to vector<25x16xf32>
    %71 = vector.extract_strided_slice %55 {offsets = [15, 0], sizes = [25, 16], strides = [1, 1]} : vector<40x16xf32> to vector<25x16xf32>
    %72 = tpu.concatenate %56, %57, %58, %59, %60, %61, %62, %63, %64, %65, %66, %67, %68, %69, %70, %71 in 1 : vector<25x16xf32>, vector<25x16xf32>, vector<25x16xf32>, vector<25x16xf32>, vector<25x16xf32>, vector<25x16xf32>, vector<25x16xf32>, vector<25x16xf32>, vector<25x16xf32>, vector<25x16xf32>, vector<25x16xf32>, vector<25x16xf32>, vector<25x16xf32>, vector<25x16xf32>, vector<25x16xf32>, vector<25x16xf32> -> vector<25x256xf32>
    %c1_16 = arith.constant 1 : index
    %c0_17 = arith.constant 0 : index
    %c0_18 = arith.constant 0 : index
    %73 = vector.load %arg1[%c1_16, %c0_17, %c0_18] : memref<2x40x16xf32, #tpu.memory_space<vmem>>, vector<1x40x16xf32>
    %74 = vector.shape_cast %73 : vector<1x40x16xf32> to vector<40x16xf32>
    %75 = vector.extract_strided_slice %74 {offsets = [0, 0], sizes = [25, 16], strides = [1, 1]} : vector<40x16xf32> to vector<25x16xf32>
    %76 = vector.extract_strided_slice %74 {offsets = [1, 0], sizes = [25, 16], strides = [1, 1]} : vector<40x16xf32> to vector<25x16xf32>
    %77 = vector.extract_strided_slice %74 {offsets = [2, 0], sizes = [25, 16], strides = [1, 1]} : vector<40x16xf32> to vector<25x16xf32>
    %78 = vector.extract_strided_slice %74 {offsets = [3, 0], sizes = [25, 16], strides = [1, 1]} : vector<40x16xf32> to vector<25x16xf32>
    %79 = vector.extract_strided_slice %74 {offsets = [4, 0], sizes = [25, 16], strides = [1, 1]} : vector<40x16xf32> to vector<25x16xf32>
    %80 = vector.extract_strided_slice %74 {offsets = [5, 0], sizes = [25, 16], strides = [1, 1]} : vector<40x16xf32> to vector<25x16xf32>
    %81 = vector.extract_strided_slice %74 {offsets = [6, 0], sizes = [25, 16], strides = [1, 1]} : vector<40x16xf32> to vector<25x16xf32>
    %82 = vector.extract_strided_slice %74 {offsets = [7, 0], sizes = [25, 16], strides = [1, 1]} : vector<40x16xf32> to vector<25x16xf32>
    %83 = vector.extract_strided_slice %74 {offsets = [8, 0], sizes = [25, 16], strides = [1, 1]} : vector<40x16xf32> to vector<25x16xf32>
    %84 = vector.extract_strided_slice %74 {offsets = [9, 0], sizes = [25, 16], strides = [1, 1]} : vector<40x16xf32> to vector<25x16xf32>
    %85 = vector.extract_strided_slice %74 {offsets = [10, 0], sizes = [25, 16], strides = [1, 1]} : vector<40x16xf32> to vector<25x16xf32>
    %86 = vector.extract_strided_slice %74 {offsets = [11, 0], sizes = [25, 16], strides = [1, 1]} : vector<40x16xf32> to vector<25x16xf32>
    %87 = vector.extract_strided_slice %74 {offsets = [12, 0], sizes = [25, 16], strides = [1, 1]} : vector<40x16xf32> to vector<25x16xf32>
    %88 = vector.extract_strided_slice %74 {offsets = [13, 0], sizes = [25, 16], strides = [1, 1]} : vector<40x16xf32> to vector<25x16xf32>
    %89 = vector.extract_strided_slice %74 {offsets = [14, 0], sizes = [25, 16], strides = [1, 1]} : vector<40x16xf32> to vector<25x16xf32>
    %90 = vector.extract_strided_slice %74 {offsets = [15, 0], sizes = [25, 16], strides = [1, 1]} : vector<40x16xf32> to vector<25x16xf32>
    %91 = tpu.concatenate %75, %76, %77, %78, %79, %80, %81, %82, %83, %84, %85, %86, %87, %88, %89, %90 in 1 : vector<25x16xf32>, vector<25x16xf32>, vector<25x16xf32>, vector<25x16xf32>, vector<25x16xf32>, vector<25x16xf32>, vector<25x16xf32>, vector<25x16xf32>, vector<25x16xf32>, vector<25x16xf32>, vector<25x16xf32>, vector<25x16xf32>, vector<25x16xf32>, vector<25x16xf32>, vector<25x16xf32>, vector<25x16xf32> -> vector<25x256xf32>
    %92 = tpu.concatenate %72, %91 in 0 : vector<25x256xf32>, vector<25x256xf32> -> vector<50x256xf32>
    %cst_19 = arith.constant dense<0.000000e+00> : vector<50x48xf32>
    %93 = tpu.matmul %92, %53, %cst_19 {dimension_numbers = #tpu.dot_dimension_numbers<[1], [0], [0], [1], [0, 0, 1, 1], [], []>} : vector<50x256xf32>, vector<256x48xf32>, vector<50x48xf32> -> vector<50x48xf32>
    %94 = vector.extract_strided_slice %93 {offsets = [0, 0], sizes = [25, 48], strides = [1, 1]} : vector<50x48xf32> to vector<25x48xf32>
    %cst_20 = arith.constant dense<0xFF800000> : vector<48xf32>
    %95 = vector.multi_reduction <maximumf>, %94, %cst_20 [0] : vector<25x48xf32> to vector<48xf32>
    %96 = vector.shape_cast %95 : vector<48xf32> to vector<1x48xf32>
    %97 = vector.extract_strided_slice %93 {offsets = [25, 0], sizes = [25, 48], strides = [1, 1]} : vector<50x48xf32> to vector<25x48xf32>
    %cst_21 = arith.constant dense<0xFF800000> : vector<48xf32>
    %98 = vector.multi_reduction <maximumf>, %97, %cst_21 [0] : vector<25x48xf32> to vector<48xf32>
    %99 = vector.shape_cast %98 : vector<48xf32> to vector<1x48xf32>
    %100 = tpu.concatenate %96, %99 in 0 : vector<1x48xf32>, vector<1x48xf32> -> vector<2x48xf32>
    %c0_22 = arith.constant 0 : index
    %c0_23 = arith.constant 0 : index
    %101 = vector.load %arg5[%c0_22, %c0_23] : memref<1x48xf32, #tpu.memory_space<vmem>>, vector<1x48xf32>
    %102 = vector.broadcast %101 : vector<1x48xf32> to vector<2x48xf32>
    %103 = arith.addf %100, %102 : vector<2x48xf32>
    %cst_24 = arith.constant 0.000000e+00 : f32
    %104 = vector.broadcast %cst_24 : f32 to vector<2x48xf32>
    %105 = arith.maximumf %103, %104 : vector<2x48xf32>
    %106 = tpu.concatenate %105, %52 in 1 : vector<2x48xf32>, vector<2x48xf32> -> vector<2x96xf32>
    %cst_25 = arith.constant 0.000000e+00 : f32
    %107 = vector.broadcast %cst_25 : f32 to vector<2x96xf32>
    %108 = arith.cmpf ogt, %106, %107 : vector<2x96xf32>
    %cst_26 = arith.constant 0.000000e+00 : f32
    %109 = vector.broadcast %cst_26 : f32 to vector<2x96xf32>
    %110 = arith.minimumf %106, %109 : vector<2x96xf32>
    %111 = math.exp %110 : vector<2x96xf32>
    %cst_27 = arith.constant 1.000000e+00 : f32
    %112 = vector.broadcast %cst_27 : f32 to vector<2x96xf32>
    %113 = arith.subf %111, %112 : vector<2x96xf32>
    %114 = arith.select %108, %106, %113 : vector<2x96xi1>, vector<2x96xf32>
    %c0_28 = arith.constant 0 : index
    %c0_29 = arith.constant 0 : index
    %115 = vector.load %arg6[%c0_28, %c0_29] : memref<96x32xf32, #tpu.memory_space<vmem>>, vector<96x32xf32>
    %cst_30 = arith.constant dense<0.000000e+00> : vector<2x32xf32>
    %116 = tpu.matmul %114, %115, %cst_30 {dimension_numbers = #tpu.dot_dimension_numbers<[1], [0], [0], [1], [0, 0, 1, 1], [], []>} : vector<2x96xf32>, vector<96x32xf32>, vector<2x32xf32> -> vector<2x32xf32>
    %c0_31 = arith.constant 0 : index
    %c0_32 = arith.constant 0 : index
    %117 = vector.load %arg7[%c0_31, %c0_32] : memref<1x32xf32, #tpu.memory_space<vmem>>, vector<1x32xf32>
    %118 = vector.broadcast %117 : vector<1x32xf32> to vector<2x32xf32>
    %119 = arith.addf %116, %118 : vector<2x32xf32>
    %cst_33 = arith.constant 0.000000e+00 : f32
    %120 = vector.broadcast %cst_33 : f32 to vector<2x32xf32>
    %121 = arith.cmpf ogt, %119, %120 : vector<2x32xf32>
    %cst_34 = arith.constant 0.000000e+00 : f32
    %122 = vector.broadcast %cst_34 : f32 to vector<2x32xf32>
    %123 = arith.minimumf %119, %122 : vector<2x32xf32>
    %124 = math.exp %123 : vector<2x32xf32>
    %cst_35 = arith.constant 1.000000e+00 : f32
    %125 = vector.broadcast %cst_35 : f32 to vector<2x32xf32>
    %126 = arith.subf %124, %125 : vector<2x32xf32>
    %127 = arith.select %121, %119, %126 : vector<2x32xi1>, vector<2x32xf32>
    %c0_36 = arith.constant 0 : index
    %c0_37 = arith.constant 0 : index
    %128 = vector.load %arg8[%c0_36, %c0_37] : memref<1x32xf32, #tpu.memory_space<vmem>>, vector<1x32xf32>
    %129 = vector.broadcast %128 : vector<1x32xf32> to vector<2x32xf32>
    %130 = arith.mulf %127, %129 : vector<2x32xf32>
    %cst_38 = arith.constant dense<0.000000e+00> : vector<2xf32>
    %131 = vector.multi_reduction <add>, %130, %cst_38 [1] : vector<2x32xf32> to vector<2xf32>
    %132 = vector.shape_cast %131 : vector<2xf32> to vector<2x1xf32>
    %c0_39 = arith.constant 0 : index
    %c0_40 = arith.constant 0 : index
    %133 = vector.load %arg9[%c0_39, %c0_40] : memref<1x1xf32, #tpu.memory_space<vmem>>, vector<1x1xf32>
    %134 = vector.broadcast %133 : vector<1x1xf32> to vector<2x1xf32>
    %135 = arith.addf %132, %134 : vector<2x1xf32>
    %136 = arith.negf %135 : vector<2x1xf32>
    %137 = math.exp %136 : vector<2x1xf32>
    %cst_41 = arith.constant 1.000000e+00 : f32
    %138 = vector.broadcast %cst_41 : f32 to vector<2x1xf32>
    %139 = arith.addf %138, %137 : vector<2x1xf32>
    %140 = arith.divf %138, %139 : vector<2x1xf32>
    %c0_42 = arith.constant 0 : index
    %c0_43 = arith.constant 0 : index
    %141 = vector.load %arg10[%c0_42, %c0_43] : memref<2x1xf32, #tpu.memory_space<vmem>>, vector<2x1xf32>
    tpu.vector_store %arg10[%c0_42, %c0_43], %140 {strides = array<i32>} : memref<2x1xf32, #tpu.memory_space<vmem>>, vector<2x1xf32>,
    return
  }
}

</mosaic_0001>

<llo_original>
// kernel: textcnn_forward.1
$region0: #{textcnn_forward.1}
  #allocation0 [shape = 'u32[]', space=smem, size = 0x4, offset = 0x4, fixed_abs, tag = 'smem constant byte address 0x4 - core index']
  #allocation1 [shape = 'u32[144,128]{1,0:T(1,128)}', space=vmem, size = 0x12000, scoped, tag = 'internal scratch']
  #allocation2 [shape = 'f32[1,1]{1,0:T(1,128)S(1)}', space=vmem, size = 0x200, scoped, tag = 'scoped memory for textcnn_forward.1']
  %s0 = inlined_call_operand.vmem [shape: f32[2,48,16], index: 0, kind: input, shape index: {}]
  %s1 = inlined_call_operand.vmem [shape: f32[2,40,16], index: 1, kind: input, shape index: {}]
  %s2 = inlined_call_operand.vmem [shape: f32[256,48], index: 2, kind: input, shape index: {}]
  %s3 = inlined_call_operand.vmem [shape: f32[1,48], index: 3, kind: input, shape index: {}]
  %s4 = inlined_call_operand.vmem [shape: f32[256,48], index: 4, kind: input, shape index: {}]
  %s5 = inlined_call_operand.vmem [shape: f32[1,48], index: 5, kind: input, shape index: {}]
  %s6 = inlined_call_operand.vmem [shape: f32[96,32], index: 6, kind: input, shape index: {}]
  %s7 = inlined_call_operand.vmem [shape: f32[1,32], index: 7, kind: input, shape index: {}]
  %s8 = inlined_call_operand.vmem [shape: f32[1,32], index: 8, kind: input, shape index: {}]
  %s9 = inlined_call_operand.<no memory space> [shape: f32[1,1], index: 9, kind: input, shape index: {}]
  %s10 = inlined_call_operand.vmem [shape: f32[2,1], index: 10, kind: output, shape index: {}]
  %s11 = sld [smem:[#allocation0]]
  $region50: #{textcnn_forward.1} parent=0
    _
  %s13 = ssub.s32 1, %s11
  %s14 = scalar_select 0, %s13, %s11
  %v15 = vstv %s9
  %16 = vst [vmem:[#allocation2] sm:$0x1] %v15
  // Predicated region
  $region2: #{textcnn_forward.1} parent=0 // pred_check
    _
  $region3: #{textcnn_forward.1} parent=0 // pred_check_branch
    %18 = sbr.rel (0) target = $region5
  $region4: #{textcnn_forward.1} parent=0 // pred_region
    _
  $region5: #{textcnn_forward.1} parent=0 // pred_fallthru
    _
  // Predicated region
  $region6: #{textcnn_forward.1} parent=0 // pred_check
    _
  $region7: #{textcnn_forward.1} parent=0 // pred_check_branch
    %20 = sbr.rel (0) target = $region9
  $region8: #{textcnn_forward.1} parent=0 // pred_region
    _
  $region9: #{textcnn_forward.1} parent=0 // pred_fallthru
    _
  // Predicated region
  $region10: #{textcnn_forward.1} parent=0 // pred_check
    _
  $region11: #{textcnn_forward.1} parent=0 // pred_check_branch
    %22 = sbr.rel (0) target = $region13
  $region12: #{textcnn_forward.1} parent=0 // pred_region
    _
  $region13: #{textcnn_forward.1} parent=0 // pred_fallthru
    _
  // Predicated region
  $region14: #{textcnn_forward.1} parent=0 // pred_check
    _
  $region15: #{textcnn_forward.1} parent=0 // pred_check_branch
    %24 = sbr.rel (0) target = $region17
  $region16: #{textcnn_forward.1} parent=0 // pred_region
    _
  $region17: #{textcnn_forward.1} parent=0 // pred_fallthru
    _
  // Predicated region
  $region18: #{textcnn_forward.1} parent=0 // pred_check
    _
  $region19: #{textcnn_forward.1} parent=0 // pred_check_branch
    %26 = sbr.rel (0) target = $region21
  $region20: #{textcnn_forward.1} parent=0 // pred_region
    _
  $region21: #{textcnn_forward.1} parent=0 // pred_fallthru
    _
  // Predicated region
  $region22: #{textcnn_forward.1} parent=0 // pred_check
    _
  $region23: #{textcnn_forward.1} parent=0 // pred_check_branch
    %28 = sbr.rel (0) target = $region25
  $region24: #{textcnn_forward.1} parent=0 // pred_region
    _
  $region25: #{textcnn_forward.1} parent=0 // pred_fallthru
    _
  // Predicated region
  $region26: #{textcnn_forward.1} parent=0 // pred_check
    _
  $region27: #{textcnn_forward.1} parent=0 // pred_check_branch
    %30 = sbr.rel (0) target = $region29
  $region28: #{textcnn_forward.1} parent=0 // pred_region
    _
  $region29: #{textcnn_forward.1} parent=0 // pred_fallthru
    _
  // Predicated region
  $region30: #{textcnn_forward.1} parent=0 // pred_check
    _
  $region31: #{textcnn_forward.1} parent=0 // pred_check_branch
    %32 = sbr.rel (0) target = $region33
  $region32: #{textcnn_forward.1} parent=0 // pred_region
    _
  $region33: #{textcnn_forward.1} parent=0 // pred_fallthru
    _
  // Predicated region
  $region34: #{textcnn_forward.1} parent=0 // pred_check
    _
  $region35: #{textcnn_forward.1} parent=0 // pred_check_branch
    %34 = sbr.rel (0) target = $region37
  $region36: #{textcnn_forward.1} parent=0 // pred_region
    _
  $region37: #{textcnn_forward.1} parent=0 // pred_fallthru
    _
  // Predicated region
  $region38: #{textcnn_forward.1} parent=0 // pred_check
    _
  $region39: #{textcnn_forward.1} parent=0 // pred_check_branch
    %36 = sbr.rel (0) target = $region41
  $region40: #{textcnn_forward.1} parent=0 // pred_region
    _
  $region41: #{textcnn_forward.1} parent=0 // pred_fallthru
    _
  %v37 = vld [vmem:[%s2] sm:$0xff]
  %v38 = vld [vmem:[%s2 + $0x8] sm:$0xff]
  %v39 = vld [vmem:[%s2 + $0x10] sm:$0xff]
  %v40 = vld [vmem:[%s2 + $0x18] sm:$0xff]
  %v41 = vld [vmem:[%s2 + $0x20] sm:$0xff]
  %v42 = vld [vmem:[%s2 + $0x28] sm:$0xff]
  %v43 = vld [vmem:[%s2 + $0x30] sm:$0xff]
  %v44 = vld [vmem:[%s2 + $0x38] sm:$0xff]
  %v45 = vld [vmem:[%s2 + $0x40] sm:$0xff]
  %v46 = vld [vmem:[%s2 + $0x48] sm:$0xff]
  %v47 = vld [vmem:[%s2 + $0x50] sm:$0xff]
  %v48 = vld [vmem:[%s2 + $0x58] sm:$0xff]
  %v49 = vld [vmem:[%s2 + $0x60] sm:$0xff]
  %v50 = vld [vmem:[%s2 + $0x68] sm:$0xff]
  %v51 = vld [vmem:[%s2 + $0x70] sm:$0xff]
  %v52 = vld [vmem:[%s2 + $0x78] sm:$0xff]
  %v53 = vld [vmem:[%s2 + $0x80] sm:$0xff]
  %v54 = vld [vmem:[%s2 + $0x88] sm:$0xff]
  %v55 = vld [vmem:[%s2 + $0x90] sm:$0xff]
  %v56 = vld [vmem:[%s2 + $0x98] sm:$0xff]
  %v57 = vld [vmem:[%s2 + $0xa0] sm:$0xff]
  %v58 = vld [vmem:[%s2 + $0xa8] sm:$0xff]
  %v59 = vld [vmem:[%s2 + $0xb0] sm:$0xff]
  %v60 = vld [vmem:[%s2 + $0xb8] sm:$0xff]
  %v61 = vld [vmem:[%s2 + $0xc0] sm:$0xff]
  %v62 = vld [vmem:[%s2 + $0xc8] sm:$0xff]
  %v63 = vld [vmem:[%s2 + $0xd0] sm:$0xff]
  %v64 = vld [vmem:[%s2 + $0xd8] sm:$0xff]
  %v65 = vld [vmem:[%s2 + $0xe0] sm:$0xff]
  %v66 = vld [vmem:[%s2 + $0xe8] sm:$0xff]
  %v67 = vld [vmem:[%s2 + $0xf0] sm:$0xff]
  %v68 = vld [vmem:[%s2 + $0xf8] sm:$0xff]
  %v69 = vld [vmem:[%s0] sm:$0xff]
  %v70 = vld [vmem:[%s0 + $0x8] sm:$0xff]
  %v71 = vld [vmem:[%s0 + $0x10] sm:$0xff]
  %v72 = vld [vmem:[%s0 + $0x18] sm:$0xff]
  %v73 = vld [vmem:[%s0 + $0x20] sm:$0xff]
  %v74 = vld [vmem:[%s0 + $0x28] sm:$0xff]
  %vm80 = vcmask 1046528
  %v81 = vrot.slane %v69, 1
  %v82 = vrot.slane %v70, 1
  %v83 = vsel %vm80, %v81, %v82
  %v84 = vrot.slane %v71, 1
  %v85 = vsel %vm80, %v82, %v84
  %v86 = vrot.slane %v72, 1
  %v87 = vsel %vm80, %v84, %v86
  %v88 = vrot.slane %v73, 1
  %v89 = vsel %vm80, %v86, %v88
  %90 = vrot.lane.b32.xlu0 %v83, 16
  %v91 = vpop.permute.xlu0 %90
  %92 = vrot.lane.b32.xlu0 %v85, 16
  %v93 = vpop.permute.xlu0 %92
  %94 = vrot.lane.b32.xlu0 %v87, 16
  %v95 = vpop.permute.xlu0 %94
  %96 = vrot.lane.b32.xlu0 %v89, 16
  %v97 = vpop.permute.xlu0 %96
  %98 = vrot.lane.b32.xlu0 %v88, 16
  %v99 = vpop.permute.xlu0 %98
  %vm105 = vcmask 1045504
  %v106 = vrot.slane %v69, 2
  %v107 = vrot.slane %v70, 2
  %v108 = vsel %vm105, %v106, %v107
  %v109 = vrot.slane %v71, 2
  %v110 = vsel %vm105, %v107, %v109
  %v111 = vrot.slane %v72, 2
  %v112 = vsel %vm105, %v109, %v111
  %v113 = vrot.slane %v73, 2
  %v114 = vsel %vm105, %v111, %v113
  %115 = vrot.lane.b32.xlu0 %v108, 32
  %v116 = vpop.permute.xlu0 %115
  %117 = vrot.lane.b32.xlu0 %v110, 32
  %v118 = vpop.permute.xlu0 %117
  %119 = vrot.lane.b32.xlu0 %v112, 32
  %v120 = vpop.permute.xlu0 %119
  %121 = vrot.lane.b32.xlu0 %v114, 32
  %v122 = vpop.permute.xlu0 %121
  %123 = vrot.lane.b32.xlu0 %v113, 32
  %v124 = vpop.permute.xlu0 %123
  %vm130 = vcmask 1044480
  %v131 = vrot.slane %v69, 3
  %v132 = vrot.slane %v70, 3
  %v133 = vsel %vm130, %v131, %v132
  %v134 = vrot.slane %v71, 3
  %v135 = vsel %vm130, %v132, %v134
  %v136 = vrot.slane %v72, 3
  %v137 = vsel %vm130, %v134, %v136
  %v138 = vrot.slane %v73, 3
  %v139 = vsel %vm130, %v136, %v138
  %140 = vrot.lane.b32.xlu0 %v133, 48
  %v141 = vpop.permute.xlu0 %140
  %142 = vrot.lane.b32.xlu0 %v135, 48
  %v143 = vpop.permute.xlu0 %142
  %144 = vrot.lane.b32.xlu0 %v137, 48
  %v145 = vpop.permute.xlu0 %144
  %146 = vrot.lane.b32.xlu0 %v139, 48
  %v147 = vpop.permute.xlu0 %146
  %148 = vrot.lane.b32.xlu0 %v138, 48
  %v149 = vpop.permute.xlu0 %148
  %vm155 = vcmask 1043456
  %v156 = vrot.slane %v69, 4
  %v157 = vrot.slane %v70, 4
  %v158 = vsel %vm155, %v156, %v157
  %v159 = vrot.slane %v71, 4
  %v160 = vsel %vm155, %v157, %v159
  %v161 = vrot.slane %v72, 4
  %v162 = vsel %vm155, %v159, %v161
  %v163 = vrot.slane %v73, 4
  %v164 = vsel %vm155, %v161, %v163
  %165 = vrot.lane.b32.xlu0 %v158, 64
  %v166 = vpop.permute.xlu0 %165
  %167 = vrot.lane.b32.xlu0 %v160, 64
  %v168 = vpop.permute.xlu0 %167
  %169 = vrot.lane.b32.xlu0 %v162, 64
  %v170 = vpop.permute.xlu0 %169
  %171 = vrot.lane.b32.xlu0 %v164, 64
  %v172 = vpop.permute.xlu0 %171
  %173 = vrot.lane.b32.xlu0 %v163, 64
  %v174 = vpop.permute.xlu0 %173
  %vm180 = vcmask 1042432
  %v181 = vrot.slane %v69, 5
  %v182 = vrot.slane %v70, 5
  %v183 = vsel %vm180, %v181, %v182
  %v184 = vrot.slane %v71, 5
  %v185 = vsel %vm180, %v182, %v184
  %v186 = vrot.slane %v72, 5
  %v187 = vsel %vm180, %v184, %v186
  %v188 = vrot.slane %v73, 5
  %v189 = vsel %vm180, %v186, %v188
  %190 = vrot.lane.b32.xlu0 %v183, 80
  %v191 = vpop.permute.xlu0 %190
  %192 = vrot.lane.b32.xlu0 %v185, 80
  %v193 = vpop.permute.xlu0 %192
  %194 = vrot.lane.b32.xlu0 %v187, 80
  %v195 = vpop.permute.xlu0 %194
  %196 = vrot.lane.b32.xlu0 %v189, 80
  %v197 = vpop.permute.xlu0 %196
  %198 = vrot.lane.b32.xlu0 %v188, 80
  %v199 = vpop.permute.xlu0 %198
  %vm205 = vcmask 1041408
  %v206 = vrot.slane %v69, 6
  %v207 = vrot.slane %v70, 6
  %v208 = vsel %vm205, %v206, %v207
  %v209 = vrot.slane %v71, 6
  %v210 = vsel %vm205, %v207, %v209
  %v211 = vrot.slane %v72, 6
  %v212 = vsel %vm205, %v209, %v211
  %v213 = vrot.slane %v73, 6
  %v214 = vsel %vm205, %v211, %v213
  %215 = vrot.lane.b32.xlu0 %v208, 96
  %v216 = vpop.permute.xlu0 %215
  %217 = vrot.lane.b32.xlu0 %v210, 96
  %v218 = vpop.permute.xlu0 %217
  %219 = vrot.lane.b32.xlu0 %v212, 96
  %v220 = vpop.permute.xlu0 %219
  %221 = vrot.lane.b32.xlu0 %v214, 96
  %v222 = vpop.permute.xlu0 %221
  %223 = vrot.lane.b32.xlu0 %v213, 96
  %v224 = vpop.permute.xlu0 %223
  %vm230 = vcmask 1040384
  %v231 = vrot.slane %v69, 7
  %v232 = vrot.slane %v70, 7
  %v233 = vsel %vm230, %v231, %v232
  %v234 = vrot.slane %v71, 7
  %v235 = vsel %vm230, %v232, %v234
  %v236 = vrot.slane %v72, 7
  %v237 = vsel %vm230, %v234, %v236
  %v238 = vrot.slane %v73, 7
  %v239 = vsel %vm230, %v236, %v238
  %240 = vrot.lane.b32.xlu0 %v233, 112
  %v241 = vpop.permute.xlu0 %240
  %242 = vrot.lane.b32.xlu0 %v235, 112
  %v243 = vpop.permute.xlu0 %242
  %244 = vrot.lane.b32.xlu0 %v237, 112
  %v245 = vpop.permute.xlu0 %244
  %246 = vrot.lane.b32.xlu0 %v239, 112
  %v247 = vpop.permute.xlu0 %246
  %248 = vrot.lane.b32.xlu0 %v238, 112
  %v249 = vpop.permute.xlu0 %248
  %v256 = vrot.slane %v74, 1
  %v257 = vsel %vm80, %v88, %v256
  %258 = vrot.lane.b32.xlu0 %v257, 16
  %v259 = vpop.permute.xlu0 %258
  %260 = vrot.lane.b32.xlu0 %v256, 16
  %v261 = vpop.permute.xlu0 %260
  %v264 = vrot.slane %v74, 2
  %v265 = vsel %vm105, %v113, %v264
  %266 = vrot.lane.b32.xlu0 %v265, 32
  %v267 = vpop.permute.xlu0 %266
  %268 = vrot.lane.b32.xlu0 %v264, 32
  %v269 = vpop.permute.xlu0 %268
  %v272 = vrot.slane %v74, 3
  %v273 = vsel %vm130, %v138, %v272
  %274 = vrot.lane.b32.xlu0 %v273, 48
  %v275 = vpop.permute.xlu0 %274
  %276 = vrot.lane.b32.xlu0 %v272, 48
  %v277 = vpop.permute.xlu0 %276
  %v280 = vrot.slane %v74, 4
  %v281 = vsel %vm155, %v163, %v280
  %282 = vrot.lane.b32.xlu0 %v281, 64
  %v283 = vpop.permute.xlu0 %282
  %284 = vrot.lane.b32.xlu0 %v280, 64
  %v285 = vpop.permute.xlu0 %284
  %v288 = vrot.slane %v74, 5
  %v289 = vsel %vm180, %v188, %v288
  %290 = vrot.lane.b32.xlu0 %v289, 80
  %v291 = vpop.permute.xlu0 %290
  %292 = vrot.lane.b32.xlu0 %v288, 80
  %v293 = vpop.permute.xlu0 %292
  %v296 = vrot.slane %v74, 6
  %v297 = vsel %vm205, %v213, %v296
  %298 = vrot.lane.b32.xlu0 %v297, 96
  %v299 = vpop.permute.xlu0 %298
  %300 = vrot.lane.b32.xlu0 %v296, 96
  %v301 = vpop.permute.xlu0 %300
  %v304 = vrot.slane %v74, 7
  %v305 = vsel %vm230, %v238, %v304
  %306 = vrot.lane.b32.xlu0 %v305, 112
  %v307 = vpop.permute.xlu0 %306
  %308 = vrot.lane.b32.xlu0 %v304, 112
  %v309 = vpop.permute.xlu0 %308
  %vm312 = vcmask 130048
  %v313 = vsel %vm312, %v69, %v91
  %v314 = vsel %vm312, %v70, %v93
  %v315 = vsel %vm312, %v71, %v95
  %v316 = vsel %vm312, %v72, %v97
  %v317 = vsel %vm312, %v73, %v99
  %vm318 = vcmask 261120
  %v319 = vsel %vm318, %v313, %v116
  %v320 = vsel %vm318, %v314, %v118
  %v321 = vsel %vm318, %v315, %v120
  %v322 = vsel %vm318, %v316, %v122
  %v323 = vsel %vm318, %v317, %v124
  %vm324 = vcmask 392192
  %v325 = vsel %vm324, %v319, %v141
  %v326 = vsel %vm324, %v320, %v143
  %v327 = vsel %vm324, %v321, %v145
  %v328 = vsel %vm324, %v322, %v147
  %v329 = vsel %vm324, %v323, %v149
  %vm330 = vcmask 523264
  %v331 = vsel %vm330, %v325, %v166
  %v332 = vsel %vm330, %v326, %v168
  %v333 = vsel %vm330, %v327, %v170
  %v334 = vsel %vm330, %v328, %v172
  %v335 = vsel %vm330, %v329, %v174
  %vm336 = vcmask 654336
  %v337 = vsel %vm336, %v331, %v191
  %v338 = vsel %vm336, %v332, %v193
  %v339 = vsel %vm336, %v333, %v195
  %v340 = vsel %vm336, %v334, %v197
  %v341 = vsel %vm336, %v335, %v199
  %vm342 = vcmask 785408
  %v343 = vsel %vm342, %v337, %v216
  %v344 = vsel %vm342, %v338, %v218
  %v345 = vsel %vm342, %v339, %v220
  %v346 = vsel %vm342, %v340, %v222
  %v347 = vsel %vm342, %v341, %v224
  %vm348 = vcmask 916480
  %v349 = vsel %vm348, %v343, %v241
  %v350 = vsel %vm348, %v344, %v243
  %v351 = vsel %vm348, %v345, %v245
  %v352 = vsel %vm348, %v346, %v247
  %v353 = vsel %vm348, %v347, %v249
  %v354 = vsel %vm312, %v73, %v259
  %v355 = vsel %vm312, %v74, %v261
  %v356 = vsel %vm318, %v354, %v267
  %v357 = vsel %vm318, %v355, %v269
  %v358 = vsel %vm324, %v356, %v275
  %v359 = vsel %vm324, %v357, %v277
  %v360 = vsel %vm330, %v358, %v283
  %v361 = vsel %vm330, %v359, %v285
  %v362 = vsel %vm336, %v360, %v291
  %v363 = vsel %vm336, %v361, %v293
  %v364 = vsel %vm342, %v362, %v299
  %v365 = vsel %vm342, %v363, %v301
  %v366 = vsel %vm348, %v364, %v307
  %v367 = vsel %vm348, %v365, %v309
  %s368 = scalar_lea.vmem %s0, 48
  %v369 = vld [vmem:[%s368] sm:$0xff]
  %v370 = vld [vmem:[%s368 + $0x8] sm:$0xff]
  %v371 = vld [vmem:[%s368 + $0x10] sm:$0xff]
  %v372 = vld [vmem:[%s368 + $0x18] sm:$0xff]
  %v373 = vld [vmem:[%s368 + $0x20] sm:$0xff]
  %v374 = vld [vmem:[%s368 + $0x28] sm:$0xff]
  %v380 = vrot.slane %v369, 1
  %v381 = vrot.slane %v370, 1
  %v382 = vsel %vm80, %v380, %v381
  %v383 = vrot.slane %v371, 1
  %v384 = vsel %vm80, %v381, %v383
  %v385 = vrot.slane %v372, 1
  %v386 = vsel %vm80, %v383, %v385
  %v387 = vrot.slane %v373, 1
  %v388 = vsel %vm80, %v385, %v387
  %389 = vrot.lane.b32.xlu0 %v382, 16
  %v390 = vpop.permute.xlu0 %389
  %391 = vrot.lane.b32.xlu0 %v384, 16
  %v392 = vpop.permute.xlu0 %391
  %393 = vrot.lane.b32.xlu0 %v386, 16
  %v394 = vpop.permute.xlu0 %393
  %395 = vrot.lane.b32.xlu0 %v388, 16
  %v396 = vpop.permute.xlu0 %395
  %397 = vrot.lane.b32.xlu0 %v387, 16
  %v398 = vpop.permute.xlu0 %397
  %v404 = vrot.slane %v369, 2
  %v405 = vrot.slane %v370, 2
  %v406 = vsel %vm105, %v404, %v405
  %v407 = vrot.slane %v371, 2
  %v408 = vsel %vm105, %v405, %v407
  %v409 = vrot.slane %v372, 2
  %v410 = vsel %vm105, %v407, %v409
  %v411 = vrot.slane %v373, 2
  %v412 = vsel %vm105, %v409, %v411
  %413 = vrot.lane.b32.xlu0 %v406, 32
  %v414 = vpop.permute.xlu0 %413
  %415 = vrot.lane.b32.xlu0 %v408, 32
  %v416 = vpop.permute.xlu0 %415
  %417 = vrot.lane.b32.xlu0 %v410, 32
  %v418 = vpop.permute.xlu0 %417
  %419 = vrot.lane.b32.xlu0 %v412, 32
  %v420 = vpop.permute.xlu0 %419
  %421 = vrot.lane.b32.xlu0 %v411, 32
  %v422 = vpop.permute.xlu0 %421
  %v428 = vrot.slane %v369, 3
  %v429 = vrot.slane %v370, 3
  %v430 = vsel %vm130, %v428, %v429
  %v431 = vrot.slane %v371, 3
  %v432 = vsel %vm130, %v429, %v431
  %v433 = vrot.slane %v372, 3
  %v434 = vsel %vm130, %v431, %v433
  %v435 = vrot.slane %v373, 3
  %v436 = vsel %vm130, %v433, %v435
  %437 = vrot.lane.b32.xlu0 %v430, 48
  %v438 = vpop.permute.xlu0 %437
  %439 = vrot.lane.b32.xlu0 %v432, 48
  %v440 = vpop.permute.xlu0 %439
  %441 = vrot.lane.b32.xlu0 %v434, 48
  %v442 = vpop.permute.xlu0 %441
  %443 = vrot.lane.b32.xlu0 %v436, 48
  %v444 = vpop.permute.xlu0 %443
  %445 = vrot.lane.b32.xlu0 %v435, 48
  %v446 = vpop.permute.xlu0 %445
  %v452 = vrot.slane %v369, 4
  %v453 = vrot.slane %v370, 4
  %v454 = vsel %vm155, %v452, %v453
  %v455 = vrot.slane %v371, 4
  %v456 = vsel %vm155, %v453, %v455
  %v457 = vrot.slane %v372, 4
  %v458 = vsel %vm155, %v455, %v457
  %v459 = vrot.slane %v373, 4
  %v460 = vsel %vm155, %v457, %v459
  %461 = vrot.lane.b32.xlu0 %v454, 64
  %v462 = vpop.permute.xlu0 %461
  %463 = vrot.lane.b32.xlu0 %v456, 64
  %v464 = vpop.permute.xlu0 %463
  %465 = vrot.lane.b32.xlu0 %v458, 64
  %v466 = vpop.permute.xlu0 %465
  %467 = vrot.lane.b32.xlu0 %v460, 64
  %v468 = vpop.permute.xlu0 %467
  %469 = vrot.lane.b32.xlu0 %v459, 64
  %v470 = vpop.permute.xlu0 %469
  %v476 = vrot.slane %v369, 5
  %v477 = vrot.slane %v370, 5
  %v478 = vsel %vm180, %v476, %v477
  %v479 = vrot.slane %v371, 5
  %v480 = vsel %vm180, %v477, %v479
  %v481 = vrot.slane %v372, 5
  %v482 = vsel %vm180, %v479, %v481
  %v483 = vrot.slane %v373, 5
  %v484 = vsel %vm180, %v481, %v483
  %485 = vrot.lane.b32.xlu0 %v478, 80
  %v486 = vpop.permute.xlu0 %485
  %487 = vrot.lane.b32.xlu0 %v480, 80
  %v488 = vpop.permute.xlu0 %487
  %489 = vrot.lane.b32.xlu0 %v482, 80
  %v490 = vpop.permute.xlu0 %489
  %491 = vrot.lane.b32.xlu0 %v484, 80
  %v492 = vpop.permute.xlu0 %491
  %493 = vrot.lane.b32.xlu0 %v483, 80
  %v494 = vpop.permute.xlu0 %493
  %v500 = vrot.slane %v369, 6
  %v501 = vrot.slane %v370, 6
  %v502 = vsel %vm205, %v500, %v501
  %v503 = vrot.slane %v371, 6
  %v504 = vsel %vm205, %v501, %v503
  %v505 = vrot.slane %v372, 6
  %v506 = vsel %vm205, %v503, %v505
  %v507 = vrot.slane %v373, 6
  %v508 = vsel %vm205, %v505, %v507
  %509 = vrot.lane.b32.xlu0 %v502, 96
  %v510 = vpop.permute.xlu0 %509
  %511 = vrot.lane.b32.xlu0 %v504, 96
  %v512 = vpop.permute.xlu0 %511
  %513 = vrot.lane.b32.xlu0 %v506, 96
  %v514 = vpop.permute.xlu0 %513
  %515 = vrot.lane.b32.xlu0 %v508, 96
  %v516 = vpop.permute.xlu0 %515
  %517 = vrot.lane.b32.xlu0 %v507, 96
  %v518 = vpop.permute.xlu0 %517
  %v524 = vrot.slane %v369, 7
  %v525 = vrot.slane %v370, 7
  %v526 = vsel %vm230, %v524, %v525
  %v527 = vrot.slane %v371, 7
  %v528 = vsel %vm230, %v525, %v527
  %v529 = vrot.slane %v372, 7
  %v530 = vsel %vm230, %v527, %v529
  %v531 = vrot.slane %v373, 7
  %v532 = vsel %vm230, %v529, %v531
  %533 = vrot.lane.b32.xlu0 %v526, 112
  %v534 = vpop.permute.xlu0 %533
  %535 = vrot.lane.b32.xlu0 %v528, 112
  %v536 = vpop.permute.xlu0 %535
  %537 = vrot.lane.b32.xlu0 %v530, 112
  %v538 = vpop.permute.xlu0 %537
  %539 = vrot.lane.b32.xlu0 %v532, 112
  %v540 = vpop.permute.xlu0 %539
  %541 = vrot.lane.b32.xlu0 %v531, 112
  %v542 = vpop.permute.xlu0 %541
  %v549 = vrot.slane %v374, 1
  %v550 = vsel %vm80, %v387, %v549
  %551 = vrot.lane.b32.xlu0 %v550, 16
  %v552 = vpop.permute.xlu0 %551
  %553 = vrot.lane.b32.xlu0 %v549, 16
  %v554 = vpop.permute.xlu0 %553
  %v557 = vrot.slane %v374, 2
  %v558 = vsel %vm105, %v411, %v557
  %559 = vrot.lane.b32.xlu0 %v558, 32
  %v560 = vpop.permute.xlu0 %559
  %561 = vrot.lane.b32.xlu0 %v557, 32
  %v562 = vpop.permute.xlu0 %561
  %v565 = vrot.slane %v374, 3
  %v566 = vsel %vm130, %v435, %v565
  %567 = vrot.lane.b32.xlu0 %v566, 48
  %v568 = vpop.permute.xlu0 %567
  %569 = vrot.lane.b32.xlu0 %v565, 48
  %v570 = vpop.permute.xlu0 %569
  %v573 = vrot.slane %v374, 4
  %v574 = vsel %vm155, %v459, %v573
  %575 = vrot.lane.b32.xlu0 %v574, 64
  %v576 = vpop.permute.xlu0 %575
  %577 = vrot.lane.b32.xlu0 %v573, 64
  %v578 = vpop.permute.xlu0 %577
  %v581 = vrot.slane %v374, 5
  %v582 = vsel %vm180, %v483, %v581
  %583 = vrot.lane.b32.xlu0 %v582, 80
  %v584 = vpop.permute.xlu0 %583
  %585 = vrot.lane.b32.xlu0 %v581, 80
  %v586 = vpop.permute.xlu0 %585
  %v589 = vrot.slane %v374, 6
  %v590 = vsel %vm205, %v507, %v589
  %591 = vrot.lane.b32.xlu0 %v590, 96
  %v592 = vpop.permute.xlu0 %591
  %593 = vrot.lane.b32.xlu0 %v589, 96
  %v594 = vpop.permute.xlu0 %593
  %v597 = vrot.slane %v374, 7
  %v598 = vsel %vm230, %v531, %v597
  %599 = vrot.lane.b32.xlu0 %v598, 112
  %v600 = vpop.permute.xlu0 %599
  %601 = vrot.lane.b32.xlu0 %v597, 112
  %v602 = vpop.permute.xlu0 %601
  %v605 = vsel %vm312, %v369, %v390
  %v606 = vsel %vm312, %v370, %v392
  %v607 = vsel %vm312, %v371, %v394
  %v608 = vsel %vm312, %v372, %v396
  %v609 = vsel %vm312, %v373, %v398
  %v610 = vsel %vm318, %v605, %v414
  %v611 = vsel %vm318, %v606, %v416
  %v612 = vsel %vm318, %v607, %v418
  %v613 = vsel %vm318, %v608, %v420
  %v614 = vsel %vm318, %v609, %v422
  %v615 = vsel %vm324, %v610, %v438
  %v616 = vsel %vm324, %v611, %v440
  %v617 = vsel %vm324, %v612, %v442
  %v618 = vsel %vm324, %v613, %v444
  %v619 = vsel %vm324, %v614, %v446
  %v620 = vsel %vm330, %v615, %v462
  %v621 = vsel %vm330, %v616, %v464
  %v622 = vsel %vm330, %v617, %v466
  %v623 = vsel %vm330, %v618, %v468
  %v624 = vsel %vm330, %v619, %v470
  %v625 = vsel %vm336, %v620, %v486
  %v626 = vsel %vm336, %v621, %v488
  %v627 = vsel %vm336, %v622, %v490
  %v628 = vsel %vm336, %v623, %v492
  %v629 = vsel %vm336, %v624, %v494
  %v630 = vsel %vm342, %v625, %v510
  %v631 = vsel %vm342, %v626, %v512
  %v632 = vsel %vm342, %v627, %v514
  %v633 = vsel %vm342, %v628, %v516
  %v634 = vsel %vm342, %v629, %v518
  %v635 = vsel %vm348, %v630, %v534
  %v636 = vsel %vm348, %v631, %v536
  %v637 = vsel %vm348, %v632, %v538
  %v638 = vsel %vm348, %v633, %v540
  %v639 = vsel %vm348, %v634, %v542
  %v640 = vsel %vm312, %v373, %v552
  %v641 = vsel %vm312, %v374, %v554
  %v642 = vsel %vm318, %v640, %v560
  %v643 = vsel %vm318, %v641, %v562
  %v644 = vsel %vm324, %v642, %v568
  %v645 = vsel %vm324, %v643, %v570
  %v646 = vsel %vm330, %v644, %v576
  %v647 = vsel %vm330, %v645, %v578
  %v648 = vsel %vm336, %v646, %v584
  %v649 = vsel %vm336, %v647, %v586
  %v650 = vsel %vm342, %v648, %v592
  %v651 = vsel %vm342, %v649, %v594
  %v652 = vsel %vm348, %v650, %v600
  %v653 = vsel %vm348, %v651, %v602
  %v661 = vrot.slane %v635, 7
  %v662 = vrot.slane %v636, 7
  %v663 = vsel %vm230, %v661, %v662
  %v664 = vrot.slane %v637, 7
  %v665 = vsel %vm230, %v662, %v664
  %v666 = vrot.slane %v638, 7
  %v667 = vsel %vm230, %v664, %v666
  %v668 = vrot.slane %v652, 7
  %v669 = vsel %vm230, %v666, %v668
  %v670 = vrot.slane %v639, 7
  %v671 = vsel %vm230, %v666, %v670
  %v672 = vrot.slane %v653, 7
  %v673 = vsel %vm230, %v668, %v672
  %v682 = vsel %vm230, %v353, %v661
  %v683 = vsel %vm230, %v367, %v662
  %684 = vmatprep.subr.mxu0 0.0
  %685 = vmatpush1.msra.mxu0 %v37
  %686 = vmatprep.subr.mxu0 0.0
  %687 = vmatpush1.msra.mxu0 %v38
  %688 = vmatprep.subr.mxu0 0.0
  %689 = vmatpush1.msra.mxu0 %v39
  %690 = vmatprep.subr.mxu0 0.0
  %691 = vmatpush1.msra.mxu0 %v40
  %692 = vmatprep.subr.mxu0 0.0
  %693 = vmatpush1.msra.mxu0 %v41
  %694 = vmatprep.subr.mxu0 0.0
  %695 = vmatpush1.msra.mxu0 %v42
  %696 = vmatprep.subr.mxu0 0.0
  %697 = vmatpush1.msra.mxu0 %v43
  %698 = vmatprep.subr.mxu0 0.0
  %699 = vmatpush1.msra.mxu0 %v44
  %700 = vmatprep.subr.mxu0 0.0
  %701 = vmatpush1.msra.mxu0 %v45
  %702 = vmatprep.subr.mxu0 0.0
  %703 = vmatpush1.msra.mxu0 %v46
  %704 = vmatprep.subr.mxu0 0.0
  %705 = vmatpush1.msra.mxu0 %v47
  %706 = vmatprep.subr.mxu0 0.0
  %707 = vmatpush1.msra.mxu0 %v48
  %708 = vmatprep.subr.mxu0 0.0
  %709 = vmatpush1.msra.mxu0 %v49
  %710 = vmatprep.subr.mxu0 0.0
  %711 = vmatpush1.msra.mxu0 %v50
  %712 = vmatprep.subr.mxu0 0.0
  %713 = vmatpush1.msra.mxu0 %v51
  %714 = vmatprep.subr.mxu0 0.0
  %715 = vmatpush1.msra.mxu0 %v52
  %716 = vmatprep.subr.mxu0 0.0
  %717 = vmatpush1.msra.mxu0 %v53
  %718 = vmatprep.subr.mxu0 0.0
  %719 = vmatpush1.msra.mxu0 %v54
  %720 = vmatprep.subr.mxu0 0.0
  %721 = vmatpush1.msra.mxu0 %v55
  %722 = vmatprep.subr.mxu0 0.0
  %723 = vmatpush1.msra.mxu0 %v56
  %724 = vmatprep.subr.mxu0 0.0
  %725 = vmatpush1.msra.mxu0 %v57
  %726 = vmatprep.subr.mxu0 0.0
  %727 = vmatpush1.msra.mxu0 %v58
  %728 = vmatprep.subr.mxu0 0.0
  %729 = vmatpush1.msra.mxu0 %v59
  %730 = vmatprep.subr.mxu0 0.0
  %731 = vmatpush1.msra.mxu0 %v60
  %732 = vmatprep.subr.mxu0 0.0
  %733 = vmatpush1.msra.mxu0 %v61
  %734 = vmatprep.subr.mxu0 0.0
  %735 = vmatpush1.msra.mxu0 %v62
  %736 = vmatprep.subr.mxu0 0.0
  %737 = vmatpush1.msra.mxu0 %v63
  %738 = vmatprep.subr.mxu0 0.0
  %739 = vmatpush1.msra.mxu0 %v64
  %740 = vmatprep.subr.mxu0 0.0
  %741 = vmatpush1.msra.mxu0 %v65
  %742 = vmatprep.subr.mxu0 0.0
  %743 = vmatpush1.msra.mxu0 %v66
  %744 = vmatprep.subr.mxu0 0.0
  %745 = vmatpush1.msra.mxu0 %v67
  %746 = vmatprep.subr.mxu0 0.0
  %747 = vmatpush1.msra.mxu0 %v68
  %748 = vmatprep.mubr.f32.mxu0 %v350
  %749 = vmatmul.mubr.f32.gmra.mrb[0].mxu0 %v349
  %v750 = vpop.f32.mrb[0].mxu0
  %v751 = vadd.f32 0.0, %v750
  %v752 = vpop.f32.mrb[0].mxu0
  %753 = vmatprep.mubr.f32.mxu0 %v351
  %754 = vmatmul.mubr.f32.gmra.mrb[0].mxu0 %v350
  %v755 = vpop.f32.mrb[0].mxu0
  %v756 = vadd.f32 0.0, %v755
  %v757 = vpop.f32.mrb[0].mxu0
  %758 = vmatprep.mubr.f32.mxu0 %v352
  %759 = vmatmul.mubr.f32.gmra.mrb[0].mxu0 %v351
  %v760 = vpop.f32.mrb[0].mxu0
  %v761 = vadd.f32 0.0, %v760
  %v762 = vpop.f32.mrb[0].mxu0
  %763 = vmatprep.mubr.f32.mxu0 %v366
  %764 = vmatmul.mubr.f32.gmra.mrb[0].mxu0 %v352
  %v765 = vpop.f32.mrb[0].mxu0
  %v766 = vadd.f32 0.0, %v765
  %v767 = vpop.f32.mrb[0].mxu0
  %768 = vmatprep.mubr.f32.mxu0 %v683
  %769 = vmatmul.mubr.f32.gmra.mrb[0].mxu0 %v682
  %v770 = vpop.f32.mrb[0].mxu0
  %v771 = vadd.f32 0.0, %v770
  %v772 = vpop.f32.mrb[0].mxu0
  %773 = vmatprep.mubr.f32.mxu0 %v665
  %774 = vmatmul.mubr.f32.gmra.mrb[0].mxu0 %v663
  %v775 = vpop.f32.mrb[0].mxu0
  %v776 = vadd.f32 0.0, %v775
  %v777 = vpop.f32.mrb[0].mxu0
  %778 = vmatprep.mubr.f32.mxu0 %v667
  %779 = vmatmul.mubr.f32.gmra.mrb[0].mxu0 %v665
  %v780 = vpop.f32.mrb[0].mxu0
  %v781 = vadd.f32 0.0, %v780
  %v782 = vpop.f32.mrb[0].mxu0
  %783 = vmatprep.mubr.f32.mxu0 %v669
  %784 = vmatmul.mubr.f32.gmra.mrb[0].mxu0 %v667
  %v785 = vpop.f32.mrb[0].mxu0
  %v786 = vadd.f32 0.0, %v785
  %v787 = vpop.f32.mrb[0].mxu0
  %788 = vmatprep.mubr.f32.mxu0 %v673
  %789 = vmatmul.mubr.f32.gmra.mrb[0].mxu0 %v671
  %v790 = vpop.f32.mrb[0].mxu0
  %v791 = vadd.f32 0.0, %v790
  %v792 = vpop.f32.mrb[0].mxu0
  %793 = vdwg.mxu0
  %v794 = vsel %vm324, %v751, -inf
  %v795 = vsel %vm324, %v756, -inf
  %v796 = vsel %vm324, %v761, -inf
  %v797 = vsel %vm324, %v766, -inf
  %vm798 = vcmask 385024
  %v799 = vsel %vm798, %v771, -inf
  %v800 = vmax.f32 %v794, %v799
  %v801 = vmax.f32 %v800, %v795
  %v802 = vmax.f32 %v796, %v797
  %v803 = vmax.f32 %v801, %v802
  %v804 = vrot.slane %v803, 4
  %v805 = vmax.f32 %v803, %v804
  %v806 = vrot.slane %v805, 2
  %v807 = vmax.f32 %v805, %v806
  %v808 = vrot.slane %v807, 1
  %v809 = vmax.f32 %v807, %v808
  %vm810 = vcmask 392193
  %v811 = vsel %vm810, %v771, -inf
  %v812 = vsel %vm324, %v776, -inf
  %v813 = vsel %vm324, %v781, -inf
  %v814 = vsel %vm324, %v786, -inf
  %vm815 = vcmask 386048
  %v816 = vsel %vm815, %v791, -inf
  %v817 = vmax.f32 %v811, %v816
  %v818 = vmax.f32 %v817, %v812
  %v819 = vmax.f32 %v813, %v814
  %v820 = vmax.f32 %v818, %v819
  %v821 = vrot.slane %v820, 4
  %v822 = vmax.f32 %v820, %v821
  %v823 = vrot.slane %v822, 2
  %v824 = vmax.f32 %v822, %v823
  %v825 = vrot.slane %v824, 1
  %v826 = vmax.f32 %v824, %v825
  %v827 = vsel %vm230, %v809, %v826
  %v828 = vld [vmem:[%s3] sm:$0x1]
  %v830 = vlaneseq
  %v831 = vshrl.u32 %v830, 7
  %v832 = vsub.s32 0, %v831
  %v833 = vrot.slane %v828, %v832
  %v835 = vadd.f32 %v827, %v833
  %v836 = vmax.f32 %v835, 0.0
  %v837 = vld [vmem:[%s4] sm:$0xff]
  %v838 = vld [vmem:[%s4 + $0x8] sm:$0xff]
  %v839 = vld [vmem:[%s4 + $0x10] sm:$0xff]
  %v840 = vld [vmem:[%s4 + $0x18] sm:$0xff]
  %v841 = vld [vmem:[%s4 + $0x20] sm:$0xff]
  %v842 = vld [vmem:[%s4 + $0x28] sm:$0xff]
  %v843 = vld [vmem:[%s4 + $0x30] sm:$0xff]
  %v844 = vld [vmem:[%s4 + $0x38] sm:$0xff]
  %v845 = vld [vmem:[%s4 + $0x40] sm:$0xff]
  %v846 = vld [vmem:[%s4 + $0x48] sm:$0xff]
  %v847 = vld [vmem:[%s4 + $0x50] sm:$0xff]
  %v848 = vld [vmem:[%s4 + $0x58] sm:$0xff]
  %v849 = vld [vmem:[%s4 + $0x60] sm:$0xff]
  %v850 = vld [vmem:[%s4 + $0x68] sm:$0xff]
  %v851 = vld [vmem:[%s4 + $0x70] sm:$0xff]
  %v852 = vld [vmem:[%s4 + $0x78] sm:$0xff]
  %v853 = vld [vmem:[%s4 + $0x80] sm:$0xff]
  %v854 = vld [vmem:[%s4 + $0x88] sm:$0xff]
  %v855 = vld [vmem:[%s4 + $0x90] sm:$0xff]
  %v856 = vld [vmem:[%s4 + $0x98] sm:$0xff]
  %v857 = vld [vmem:[%s4 + $0xa0] sm:$0xff]
  %v858 = vld [vmem:[%s4 + $0xa8] sm:$0xff]
  %v859 = vld [vmem:[%s4 + $0xb0] sm:$0xff]
  %v860 = vld [vmem:[%s4 + $0xb8] sm:$0xff]
  %v861 = vld [vmem:[%s4 + $0xc0] sm:$0xff]
  %v862 = vld [vmem:[%s4 + $0xc8] sm:$0xff]
  %v863 = vld [vmem:[%s4 + $0xd0] sm:$0xff]
  %v864 = vld [vmem:[%s4 + $0xd8] sm:$0xff]
  %v865 = vld [vmem:[%s4 + $0xe0] sm:$0xff]
  %v866 = vld [vmem:[%s4 + $0xe8] sm:$0xff]
  %v867 = vld [vmem:[%s4 + $0xf0] sm:$0xff]
  %v868 = vld [vmem:[%s4 + $0xf8] sm:$0xff]
  %v869 = vld [vmem:[%s1] sm:$0xff]
  %v870 = vld [vmem:[%s1 + $0x8] sm:$0xff]
  %v871 = vld [vmem:[%s1 + $0x10] sm:$0xff]
  %v872 = vld [vmem:[%s1 + $0x18] sm:$0xff]
  %v873 = vld [vmem:[%s1 + $0x20] sm:$0xff]
  %v878 = vrot.slane %v869, 1
  %v879 = vrot.slane %v870, 1
  %v880 = vsel %vm80, %v878, %v879
  %v881 = vrot.slane %v871, 1
  %v882 = vsel %vm80, %v879, %v881
  %v883 = vrot.slane %v872, 1
  %v884 = vsel %vm80, %v881, %v883
  %885 = vrot.lane.b32.xlu0 %v880, 16
  %v886 = vpop.permute.xlu0 %885
  %887 = vrot.lane.b32.xlu0 %v882, 16
  %v888 = vpop.permute.xlu0 %887
  %889 = vrot.lane.b32.xlu0 %v884, 16
  %v890 = vpop.permute.xlu0 %889
  %891 = vrot.lane.b32.xlu0 %v883, 16
  %v892 = vpop.permute.xlu0 %891
  %v897 = vrot.slane %v869, 2
  %v898 = vrot.slane %v870, 2
  %v899 = vsel %vm105, %v897, %v898
  %v900 = vrot.slane %v871, 2
  %v901 = vsel %vm105, %v898, %v900
  %v902 = vrot.slane %v872, 2
  %v903 = vsel %vm105, %v900, %v902
  %904 = vrot.lane.b32.xlu0 %v899, 32
  %v905 = vpop.permute.xlu0 %904
  %906 = vrot.lane.b32.xlu0 %v901, 32
  %v907 = vpop.permute.xlu0 %906
  %908 = vrot.lane.b32.xlu0 %v903, 32
  %v909 = vpop.permute.xlu0 %908
  %910 = vrot.lane.b32.xlu0 %v902, 32
  %v911 = vpop.permute.xlu0 %910
  %v916 = vrot.slane %v869, 3
  %v917 = vrot.slane %v870, 3
  %v918 = vsel %vm130, %v916, %v917
  %v919 = vrot.slane %v871, 3
  %v920 = vsel %vm130, %v917, %v919
  %v921 = vrot.slane %v872, 3
  %v922 = vsel %vm130, %v919, %v921
  %923 = vrot.lane.b32.xlu0 %v918, 48
  %v924 = vpop.permute.xlu0 %923
  %925 = vrot.lane.b32.xlu0 %v920, 48
  %v926 = vpop.permute.xlu0 %925
  %927 = vrot.lane.b32.xlu0 %v922, 48
  %v928 = vpop.permute.xlu0 %927
  %929 = vrot.lane.b32.xlu0 %v921, 48
  %v930 = vpop.permute.xlu0 %929
  %v935 = vrot.slane %v869, 4
  %v936 = vrot.slane %v870, 4
  %v937 = vsel %vm155, %v935, %v936
  %v938 = vrot.slane %v871, 4
  %v939 = vsel %vm155, %v936, %v938
  %v940 = vrot.slane %v872, 4
  %v941 = vsel %vm155, %v938, %v940
  %942 = vrot.lane.b32.xlu0 %v937, 64
  %v943 = vpop.permute.xlu0 %942
  %944 = vrot.lane.b32.xlu0 %v939, 64
  %v945 = vpop.permute.xlu0 %944
  %946 = vrot.lane.b32.xlu0 %v941, 64
  %v947 = vpop.permute.xlu0 %946
  %948 = vrot.lane.b32.xlu0 %v940, 64
  %v949 = vpop.permute.xlu0 %948
  %v954 = vrot.slane %v869, 5
  %v955 = vrot.slane %v870, 5
  %v956 = vsel %vm180, %v954, %v955
  %v957 = vrot.slane %v871, 5
  %v958 = vsel %vm180, %v955, %v957
  %v959 = vrot.slane %v872, 5
  %v960 = vsel %vm180, %v957, %v959
  %961 = vrot.lane.b32.xlu0 %v956, 80
  %v962 = vpop.permute.xlu0 %961
  %963 = vrot.lane.b32.xlu0 %v958, 80
  %v964 = vpop.permute.xlu0 %963
  %965 = vrot.lane.b32.xlu0 %v960, 80
  %v966 = vpop.permute.xlu0 %965
  %967 = vrot.lane.b32.xlu0 %v959, 80
  %v968 = vpop.permute.xlu0 %967
  %v973 = vrot.slane %v869, 6
  %v974 = vrot.slane %v870, 6
  %v975 = vsel %vm205, %v973, %v974
  %v976 = vrot.slane %v871, 6
  %v977 = vsel %vm205, %v974, %v976
  %v978 = vrot.slane %v872, 6
  %v979 = vsel %vm205, %v976, %v978
  %980 = vrot.lane.b32.xlu0 %v975, 96
  %v981 = vpop.permute.xlu0 %980
  %982 = vrot.lane.b32.xlu0 %v977, 96
  %v983 = vpop.permute.xlu0 %982
  %984 = vrot.lane.b32.xlu0 %v979, 96
  %v985 = vpop.permute.xlu0 %984
  %986 = vrot.lane.b32.xlu0 %v978, 96
  %v987 = vpop.permute.xlu0 %986
  %v992 = vrot.slane %v869, 7
  %v993 = vrot.slane %v870, 7
  %v994 = vsel %vm230, %v992, %v993
  %v995 = vrot.slane %v871, 7
  %v996 = vsel %vm230, %v993, %v995
  %v997 = vrot.slane %v872, 7
  %v998 = vsel %vm230, %v995, %v997
  %999 = vrot.lane.b32.xlu0 %v994, 112
  %v1000 = vpop.permute.xlu0 %999
  %1001 = vrot.lane.b32.xlu0 %v996, 112
  %v1002 = vpop.permute.xlu0 %1001
  %1003 = vrot.lane.b32.xlu0 %v998, 112
  %v1004 = vpop.permute.xlu0 %1003
  %1005 = vrot.lane.b32.xlu0 %v997, 112
  %v1006 = vpop.permute.xlu0 %1005
  %v1012 = vrot.slane %v873, 1
  %v1013 = vsel %vm80, %v883, %v1012
  %1014 = vrot.lane.b32.xlu0 %v1013, 16
  %v1015 = vpop.permute.xlu0 %1014
  %1016 = vrot.lane.b32.xlu0 %v1012, 16
  %v1017 = vpop.permute.xlu0 %1016
  %v1020 = vrot.slane %v873, 2
  %v1021 = vsel %vm105, %v902, %v1020
  %1022 = vrot.lane.b32.xlu0 %v1021, 32
  %v1023 = vpop.permute.xlu0 %1022
  %1024 = vrot.lane.b32.xlu0 %v1020, 32
  %v1025 = vpop.permute.xlu0 %1024
  %v1028 = vrot.slane %v873, 3
  %v1029 = vsel %vm130, %v921, %v1028
  %1030 = vrot.lane.b32.xlu0 %v1029, 48
  %v1031 = vpop.permute.xlu0 %1030
  %1032 = vrot.lane.b32.xlu0 %v1028, 48
  %v1033 = vpop.permute.xlu0 %1032
  %v1036 = vrot.slane %v873, 4
  %v1037 = vsel %vm155, %v940, %v1036
  %1038 = vrot.lane.b32.xlu0 %v1037, 64
  %v1039 = vpop.permute.xlu0 %1038
  %1040 = vrot.lane.b32.xlu0 %v1036, 64
  %v1041 = vpop.permute.xlu0 %1040
  %v1044 = vrot.slane %v873, 5
  %v1045 = vsel %vm180, %v959, %v1044
  %1046 = vrot.lane.b32.xlu0 %v1045, 80
  %v1047 = vpop.permute.xlu0 %1046
  %1048 = vrot.lane.b32.xlu0 %v1044, 80
  %v1049 = vpop.permute.xlu0 %1048
  %v1052 = vrot.slane %v873, 6
  %v1053 = vsel %vm205, %v978, %v1052
  %1054 = vrot.lane.b32.xlu0 %v1053, 96
  %v1055 = vpop.permute.xlu0 %1054
  %1056 = vrot.lane.b32.xlu0 %v1052, 96
  %v1057 = vpop.permute.xlu0 %1056
  %v1060 = vrot.slane %v873, 7
  %v1061 = vsel %vm230, %v997, %v1060
  %1062 = vrot.lane.b32.xlu0 %v1061, 112
  %v1063 = vpop.permute.xlu0 %1062
  %1064 = vrot.lane.b32.xlu0 %v1060, 112
  %v1065 = vpop.permute.xlu0 %1064
  %v1068 = vsel %vm312, %v869, %v886
  %v1069 = vsel %vm312, %v870, %v888
  %v1070 = vsel %vm312, %v871, %v890
  %v1071 = vsel %vm312, %v872, %v892
  %v1072 = vsel %vm318, %v1068, %v905
  %v1073 = vsel %vm318, %v1069, %v907
  %v1074 = vsel %vm318, %v1070, %v909
  %v1075 = vsel %vm318, %v1071, %v911
  %v1076 = vsel %vm324, %v1072, %v924
  %v1077 = vsel %vm324, %v1073, %v926
  %v1078 = vsel %vm324, %v1074, %v928
  %v1079 = vsel %vm324, %v1075, %v930
  %v1080 = vsel %vm330, %v1076, %v943
  %v1081 = vsel %vm330, %v1077, %v945
  %v1082 = vsel %vm330, %v1078, %v947
  %v1083 = vsel %vm330, %v1079, %v949
  %v1084 = vsel %vm336, %v1080, %v962
  %v1085 = vsel %vm336, %v1081, %v964
  %v1086 = vsel %vm336, %v1082, %v966
  %v1087 = vsel %vm336, %v1083, %v968
  %v1088 = vsel %vm342, %v1084, %v981
  %v1089 = vsel %vm342, %v1085, %v983
  %v1090 = vsel %vm342, %v1086, %v985
  %v1091 = vsel %vm342, %v1087, %v987
  %v1092 = vsel %vm348, %v1088, %v1000
  %v1093 = vsel %vm348, %v1089, %v1002
  %v1094 = vsel %vm348, %v1090, %v1004
  %v1095 = vsel %vm348, %v1091, %v1006
  %v1096 = vsel %vm312, %v872, %v1015
  %v1097 = vsel %vm312, %v873, %v1017
  %v1098 = vsel %vm318, %v1096, %v1023
  %v1099 = vsel %vm318, %v1097, %v1025
  %v1100 = vsel %vm324, %v1098, %v1031
  %v1101 = vsel %vm324, %v1099, %v1033
  %v1102 = vsel %vm330, %v1100, %v1039
  %v1103 = vsel %vm330, %v1101, %v1041
  %v1104 = vsel %vm336, %v1102, %v1047
  %v1105 = vsel %vm336, %v1103, %v1049
  %v1106 = vsel %vm342, %v1104, %v1055
  %v1107 = vsel %vm342, %v1105, %v1057
  %v1108 = vsel %vm348, %v1106, %v1063
  %v1109 = vsel %vm348, %v1107, %v1065
  %s1110 = scalar_lea.vmem %s1, 40
  %v1111 = vld [vmem:[%s1110] sm:$0xff]
  %v1112 = vld [vmem:[%s1110 + $0x8] sm:$0xff]
  %v1113 = vld [vmem:[%s1110 + $0x10] sm:$0xff]
  %v1114 = vld [vmem:[%s1110 + $0x18] sm:$0xff]
  %v1115 = vld [vmem:[%s1110 + $0x20] sm:$0xff]
  %v1120 = vrot.slane %v1111, 1
  %v1121 = vrot.slane %v1112, 1
  %v1122 = vsel %vm80, %v1120, %v1121
  %v1123 = vrot.slane %v1113, 1
  %v1124 = vsel %vm80, %v1121, %v1123
  %v1125 = vrot.slane %v1114, 1
  %v1126 = vsel %vm80, %v1123, %v1125
  %1127 = vrot.lane.b32.xlu0 %v1122, 16
  %v1128 = vpop.permute.xlu0 %1127
  %1129 = vrot.lane.b32.xlu0 %v1124, 16
  %v1130 = vpop.permute.xlu0 %1129
  %1131 = vrot.lane.b32.xlu0 %v1126, 16
  %v1132 = vpop.permute.xlu0 %1131
  %1133 = vrot.lane.b32.xlu0 %v1125, 16
  %v1134 = vpop.permute.xlu0 %1133
  %v1139 = vrot.slane %v1111, 2
  %v1140 = vrot.slane %v1112, 2
  %v1141 = vsel %vm105, %v1139, %v1140
  %v1142 = vrot.slane %v1113, 2
  %v1143 = vsel %vm105, %v1140, %v1142
  %v1144 = vrot.slane %v1114, 2
  %v1145 = vsel %vm105, %v1142, %v1144
  %1146 = vrot.lane.b32.xlu0 %v1141, 32
  %v1147 = vpop.permute.xlu0 %1146
  %1148 = vrot.lane.b32.xlu0 %v1143, 32
  %v1149 = vpop.permute.xlu0 %1148
  %1150 = vrot.lane.b32.xlu0 %v1145, 32
  %v1151 = vpop.permute.xlu0 %1150
  %1152 = vrot.lane.b32.xlu0 %v1144, 32
  %v1153 = vpop.permute.xlu0 %1152
  %v1158 = vrot.slane %v1111, 3
  %v1159 = vrot.slane %v1112, 3
  %v1160 = vsel %vm130, %v1158, %v1159
  %v1161 = vrot.slane %v1113, 3
  %v1162 = vsel %vm130, %v1159, %v1161
  %v1163 = vrot.slane %v1114, 3
  %v1164 = vsel %vm130, %v1161, %v1163
  %1165 = vrot.lane.b32.xlu0 %v1160, 48
  %v1166 = vpop.permute.xlu0 %1165
  %1167 = vrot.lane.b32.xlu0 %v1162, 48
  %v1168 = vpop.permute.xlu0 %1167
  %1169 = vrot.lane.b32.xlu0 %v1164, 48
  %v1170 = vpop.permute.xlu0 %1169
  %1171 = vrot.lane.b32.xlu0 %v1163, 48
  %v1172 = vpop.permute.xlu0 %1171
  %v1177 = vrot.slane %v1111, 4
  %v1178 = vrot.slane %v1112, 4
  %v1179 = vsel %vm155, %v1177, %v1178
  %v1180 = vrot.slane %v1113, 4
  %v1181 = vsel %vm155, %v1178, %v1180
  %v1182 = vrot.slane %v1114, 4
  %v1183 = vsel %vm155, %v1180, %v1182
  %1184 = vrot.lane.b32.xlu0 %v1179, 64
  %v1185 = vpop.permute.xlu0 %1184
  %1186 = vrot.lane.b32.xlu0 %v1181, 64
  %v1187 = vpop.permute.xlu0 %1186
  %1188 = vrot.lane.b32.xlu0 %v1183, 64
  %v1189 = vpop.permute.xlu0 %1188
  %1190 = vrot.lane.b32.xlu0 %v1182, 64
  %v1191 = vpop.permute.xlu0 %1190
  %v1196 = vrot.slane %v1111, 5
  %v1197 = vrot.slane %v1112, 5
  %v1198 = vsel %vm180, %v1196, %v1197
  %v1199 = vrot.slane %v1113, 5
  %v1200 = vsel %vm180, %v1197, %v1199
  %v1201 = vrot.slane %v1114, 5
  %v1202 = vsel %vm180, %v1199, %v1201
  %1203 = vrot.lane.b32.xlu0 %v1198, 80
  %v1204 = vpop.permute.xlu0 %1203
  %1205 = vrot.lane.b32.xlu0 %v1200, 80
  %v1206 = vpop.permute.xlu0 %1205
  %1207 = vrot.lane.b32.xlu0 %v1202, 80
  %v1208 = vpop.permute.xlu0 %1207
  %1209 = vrot.lane.b32.xlu0 %v1201, 80
  %v1210 = vpop.permute.xlu0 %1209
  %v1215 = vrot.slane %v1111, 6
  %v1216 = vrot.slane %v1112, 6
  %v1217 = vsel %vm205, %v1215, %v1216
  %v1218 = vrot.slane %v1113, 6
  %v1219 = vsel %vm205, %v1216, %v1218
  %v1220 = vrot.slane %v1114, 6
  %v1221 = vsel %vm205, %v1218, %v1220
  %1222 = vrot.lane.b32.xlu0 %v1217, 96
  %v1223 = vpop.permute.xlu0 %1222
  %1224 = vrot.lane.b32.xlu0 %v1219, 96
  %v1225 = vpop.permute.xlu0 %1224
  %1226 = vrot.lane.b32.xlu0 %v1221, 96
  %v1227 = vpop.permute.xlu0 %1226
  %1228 = vrot.lane.b32.xlu0 %v1220, 96
  %v1229 = vpop.permute.xlu0 %1228
  %v1234 = vrot.slane %v1111, 7
  %v1235 = vrot.slane %v1112, 7
  %v1236 = vsel %vm230, %v1234, %v1235
  %v1237 = vrot.slane %v1113, 7
  %v1238 = vsel %vm230, %v1235, %v1237
  %v1239 = vrot.slane %v1114, 7
  %v1240 = vsel %vm230, %v1237, %v1239
  %1241 = vrot.lane.b32.xlu0 %v1236, 112
  %v1242 = vpop.permute.xlu0 %1241
  %1243 = vrot.lane.b32.xlu0 %v1238, 112
  %v1244 = vpop.permute.xlu0 %1243
  %1245 = vrot.lane.b32.xlu0 %v1240, 112
  %v1246 = vpop.permute.xlu0 %1245
  %1247 = vrot.lane.b32.xlu0 %v1239, 112
  %v1248 = vpop.permute.xlu0 %1247
  %v1254 = vrot.slane %v1115, 1
  %v1255 = vsel %vm80, %v1125, %v1254
  %1256 = vrot.lane.b32.xlu0 %v1255, 16
  %v1257 = vpop.permute.xlu0 %1256
  %1258 = vrot.lane.b32.xlu0 %v1254, 16
  %v1259 = vpop.permute.xlu0 %1258
  %v1262 = vrot.slane %v1115, 2
  %v1263 = vsel %vm105, %v1144, %v1262
  %1264 = vrot.lane.b32.xlu0 %v1263, 32
  %v1265 = vpop.permute.xlu0 %1264
  %1266 = vrot.lane.b32.xlu0 %v1262, 32
  %v1267 = vpop.permute.xlu0 %1266
  %v1270 = vrot.slane %v1115, 3
  %v1271 = vsel %vm130, %v1163, %v1270
  %1272 = vrot.lane.b32.xlu0 %v1271, 48
  %v1273 = vpop.permute.xlu0 %1272
  %1274 = vrot.lane.b32.xlu0 %v1270, 48
  %v1275 = vpop.permute.xlu0 %1274
  %v1278 = vrot.slane %v1115, 4
  %v1279 = vsel %vm155, %v1182, %v1278
  %1280 = vrot.lane.b32.xlu0 %v1279, 64
  %v1281 = vpop.permute.xlu0 %1280
  %1282 = vrot.lane.b32.xlu0 %v1278, 64
  %v1283 = vpop.permute.xlu0 %1282
  %v1286 = vrot.slane %v1115, 5
  %v1287 = vsel %vm180, %v1201, %v1286
  %1288 = vrot.lane.b32.xlu0 %v1287, 80
  %v1289 = vpop.permute.xlu0 %1288
  %1290 = vrot.lane.b32.xlu0 %v1286, 80
  %v1291 = vpop.permute.xlu0 %1290
  %v1294 = vrot.slane %v1115, 6
  %v1295 = vsel %vm205, %v1220, %v1294
  %1296 = vrot.lane.b32.xlu0 %v1295, 96
  %v1297 = vpop.permute.xlu0 %1296
  %1298 = vrot.lane.b32.xlu0 %v1294, 96
  %v1299 = vpop.permute.xlu0 %1298
  %v1302 = vrot.slane %v1115, 7
  %v1303 = vsel %vm230, %v1239, %v1302
  %1304 = vrot.lane.b32.xlu0 %v1303, 112
  %v1305 = vpop.permute.xlu0 %1304
  %1306 = vrot.lane.b32.xlu0 %v1302, 112
  %v1307 = vpop.permute.xlu0 %1306
  %v1310 = vsel %vm312, %v1111, %v1128
  %v1311 = vsel %vm312, %v1112, %v1130
  %v1312 = vsel %vm312, %v1113, %v1132
  %v1313 = vsel %vm312, %v1114, %v1134
  %v1314 = vsel %vm318, %v1310, %v1147
  %v1315 = vsel %vm318, %v1311, %v1149
  %v1316 = vsel %vm318, %v1312, %v1151
  %v1317 = vsel %vm318, %v1313, %v1153
  %v1318 = vsel %vm324, %v1314, %v1166
  %v1319 = vsel %vm324, %v1315, %v1168
  %v1320 = vsel %vm324, %v1316, %v1170
  %v1321 = vsel %vm324, %v1317, %v1172
  %v1322 = vsel %vm330, %v1318, %v1185
  %v1323 = vsel %vm330, %v1319, %v1187
  %v1324 = vsel %vm330, %v1320, %v1189
  %v1325 = vsel %vm330, %v1321, %v1191
  %v1326 = vsel %vm336, %v1322, %v1204
  %v1327 = vsel %vm336, %v1323, %v1206
  %v1328 = vsel %vm336, %v1324, %v1208
  %v1329 = vsel %vm336, %v1325, %v1210
  %v1330 = vsel %vm342, %v1326, %v1223
  %v1331 = vsel %vm342, %v1327, %v1225
  %v1332 = vsel %vm342, %v1328, %v1227
  %v1333 = vsel %vm342, %v1329, %v1229
  %v1334 = vsel %vm348, %v1330, %v1242
  %v1335 = vsel %vm348, %v1331, %v1244
  %v1336 = vsel %vm348, %v1332, %v1246
  %v1337 = vsel %vm348, %v1333, %v1248
  %v1338 = vsel %vm312, %v1114, %v1257
  %v1339 = vsel %vm312, %v1115, %v1259
  %v1340 = vsel %vm318, %v1338, %v1265
  %v1341 = vsel %vm318, %v1339, %v1267
  %v1342 = vsel %vm324, %v1340, %v1273
  %v1343 = vsel %vm324, %v1341, %v1275
  %v1344 = vsel %vm330, %v1342, %v1281
  %v1345 = vsel %vm330, %v1343, %v1283
  %v1346 = vsel %vm336, %v1344, %v1289
  %v1347 = vsel %vm336, %v1345, %v1291
  %v1348 = vsel %vm342, %v1346, %v1297
  %v1349 = vsel %vm342, %v1347, %v1299
  %v1350 = vsel %vm348, %v1348, %v1305
  %v1351 = vsel %vm348, %v1349, %v1307
  %v1358 = vrot.slane %v1334, 7
  %v1359 = vrot.slane %v1335, 7
  %v1360 = vsel %vm230, %v1358, %v1359
  %v1361 = vrot.slane %v1336, 7
  %v1362 = vsel %vm230, %v1359, %v1361
  %v1363 = vrot.slane %v1350, 7
  %v1364 = vsel %vm230, %v1361, %v1363
  %v1365 = vrot.slane %v1337, 7
  %v1366 = vsel %vm230, %v1361, %v1365
  %v1367 = vrot.slane %v1351, 7
  %v1368 = vsel %vm230, %v1363, %v1367
  %v1376 = vsel %vm230, %v1095, %v1358
  %v1377 = vsel %vm230, %v1109, %v1359
  %1378 = vmatprep.subr.mxu0 0.0
  %1379 = vmatpush1.msra.mxu0 %v837
  %1380 = vmatprep.subr.mxu0 0.0
  %1381 = vmatpush1.msra.mxu0 %v838
  %1382 = vmatprep.subr.mxu0 0.0
  %1383 = vmatpush1.msra.mxu0 %v839
  %1384 = vmatprep.subr.mxu0 0.0
  %1385 = vmatpush1.msra.mxu0 %v840
  %1386 = vmatprep.subr.mxu0 0.0
  %1387 = vmatpush1.msra.mxu0 %v841
  %1388 = vmatprep.subr.mxu0 0.0
  %1389 = vmatpush1.msra.mxu0 %v842
  %1390 = vmatprep.subr.mxu0 0.0
  %1391 = vmatpush1.msra.mxu0 %v843
  %1392 = vmatprep.subr.mxu0 0.0
  %1393 = vmatpush1.msra.mxu0 %v844
  %1394 = vmatprep.subr.mxu0 0.0
  %1395 = vmatpush1.msra.mxu0 %v845
  %1396 = vmatprep.subr.mxu0 0.0
  %1397 = vmatpush1.msra.mxu0 %v846
  %1398 = vmatprep.subr.mxu0 0.0
  %1399 = vmatpush1.msra.mxu0 %v847
  %1400 = vmatprep.subr.mxu0 0.0
  %1401 = vmatpush1.msra.mxu0 %v848
  %1402 = vmatprep.subr.mxu0 0.0
  %1403 = vmatpush1.msra.mxu0 %v849
  %1404 = vmatprep.subr.mxu0 0.0
  %1405 = vmatpush1.msra.mxu0 %v850
  %1406 = vmatprep.subr.mxu0 0.0
  %1407 = vmatpush1.msra.mxu0 %v851
  %1408 = vmatprep.subr.mxu0 0.0
  %1409 = vmatpush1.msra.mxu0 %v852
  %1410 = vmatprep.subr.mxu0 0.0
  %1411 = vmatpush1.msra.mxu0 %v853
  %1412 = vmatprep.subr.mxu0 0.0
  %1413 = vmatpush1.msra.mxu0 %v854
  %1414 = vmatprep.subr.mxu0 0.0
  %1415 = vmatpush1.msra.mxu0 %v855
  %1416 = vmatprep.subr.mxu0 0.0
  %1417 = vmatpush1.msra.mxu0 %v856
  %1418 = vmatprep.subr.mxu0 0.0
  %1419 = vmatpush1.msra.mxu0 %v857
  %1420 = vmatprep.subr.mxu0 0.0
  %1421 = vmatpush1.msra.mxu0 %v858
  %1422 = vmatprep.subr.mxu0 0.0
  %1423 = vmatpush1.msra.mxu0 %v859
  %1424 = vmatprep.subr.mxu0 0.0
  %1425 = vmatpush1.msra.mxu0 %v860
  %1426 = vmatprep.subr.mxu0 0.0
  %1427 = vmatpush1.msra.mxu0 %v861
  %1428 = vmatprep.subr.mxu0 0.0
  %1429 = vmatpush1.msra.mxu0 %v862
  %1430 = vmatprep.subr.mxu0 0.0
  %1431 = vmatpush1.msra.mxu0 %v863
  %1432 = vmatprep.subr.mxu0 0.0
  %1433 = vmatpush1.msra.mxu0 %v864
  %1434 = vmatprep.subr.mxu0 0.0
  %1435 = vmatpush1.msra.mxu0 %v865
  %1436 = vmatprep.subr.mxu0 0.0
  %1437 = vmatpush1.msra.mxu0 %v866
  %1438 = vmatprep.subr.mxu0 0.0
  %1439 = vmatpush1.msra.mxu0 %v867
  %1440 = vmatprep.subr.mxu0 0.0
  %1441 = vmatpush1.msra.mxu0 %v868
  %1442 = vmatprep.mubr.f32.mxu0 %v1093
  %1443 = vmatmul.mubr.f32.gmra.mrb[0].mxu0 %v1092
  %v1444 = vpop.f32.mrb[0].mxu0
  %v1445 = vadd.f32 0.0, %v1444
  %v1446 = vpop.f32.mrb[0].mxu0
  %1447 = vmatprep.mubr.f32.mxu0 %v1094
  %1448 = vmatmul.mubr.f32.gmra.mrb[0].mxu0 %v1093
  %v1449 = vpop.f32.mrb[0].mxu0
  %v1450 = vadd.f32 0.0, %v1449
  %v1451 = vpop.f32.mrb[0].mxu0
  %1452 = vmatprep.mubr.f32.mxu0 %v1108
  %1453 = vmatmul.mubr.f32.gmra.mrb[0].mxu0 %v1094
  %v1454 = vpop.f32.mrb[0].mxu0
  %v1455 = vadd.f32 0.0, %v1454
  %v1456 = vpop.f32.mrb[0].mxu0
  %1457 = vmatprep.mubr.f32.mxu0 %v1377
  %1458 = vmatmul.mubr.f32.gmra.mrb[0].mxu0 %v1376
  %v1459 = vpop.f32.mrb[0].mxu0
  %v1460 = vadd.f32 0.0, %v1459
  %v1461 = vpop.f32.mrb[0].mxu0
  %1462 = vmatprep.mubr.f32.mxu0 %v1362
  %1463 = vmatmul.mubr.f32.gmra.mrb[0].mxu0 %v1360
  %v1464 = vpop.f32.mrb[0].mxu0
  %v1465 = vadd.f32 0.0, %v1464
  %v1466 = vpop.f32.mrb[0].mxu0
  %1467 = vmatprep.mubr.f32.mxu0 %v1364
  %1468 = vmatmul.mubr.f32.gmra.mrb[0].mxu0 %v1362
  %v1469 = vpop.f32.mrb[0].mxu0
  %v1470 = vadd.f32 0.0, %v1469
  %v1471 = vpop.f32.mrb[0].mxu0
  %1472 = vmatprep.mubr.f32.mxu0 %v1368
  %1473 = vmatmul.mubr.f32.gmra.mrb[0].mxu0 %v1366
  %v1474 = vpop.f32.mrb[0].mxu0
  %v1475 = vadd.f32 0.0, %v1474
  %v1476 = vpop.f32.mrb[0].mxu0
  %1477 = vdwg.mxu0
  %v1478 = vsel %vm324, %v1445, -inf
  %v1479 = vsel %vm324, %v1450, -inf
  %v1480 = vsel %vm324, %v1455, -inf
  %v1481 = vsel %vm798, %v1460, -inf
  %v1482 = vmax.f32 %v1478, %v1479
  %v1483 = vmax.f32 %v1480, %v1481
  %v1484 = vmax.f32 %v1482, %v1483
  %v1485 = vrot.slane %v1484, 4
  %v1486 = vmax.f32 %v1484, %v1485
  %v1487 = vrot.slane %v1486, 2
  %v1488 = vmax.f32 %v1486, %v1487
  %v1489 = vrot.slane %v1488, 1
  %v1490 = vmax.f32 %v1488, %v1489
  %v1491 = vsel %vm810, %v1460, -inf
  %v1492 = vsel %vm324, %v1465, -inf
  %v1493 = vsel %vm324, %v1470, -inf
  %v1494 = vsel %vm815, %v1475, -inf
  %v1495 = vmax.f32 %v1491, %v1492
  %v1496 = vmax.f32 %v1493, %v1494
  %v1497 = vmax.f32 %v1495, %v1496
  %v1498 = vrot.slane %v1497, 4
  %v1499 = vmax.f32 %v1497, %v1498
  %v1500 = vrot.slane %v1499, 2
  %v1501 = vmax.f32 %v1499, %v1500
  %v1502 = vrot.slane %v1501, 1
  %v1503 = vmax.f32 %v1501, %v1502
  %v1504 = vsel %vm230, %v1490, %v1503
  %v1505 = vld [vmem:[%s5] sm:$0x1]
  %v1507 = vlaneseq
  %v1508 = vshrl.u32 %v1507, 7
  %v1509 = vsub.s32 0, %v1508
  %v1510 = vrot.slane %v1505, %v1509
  %v1512 = vadd.f32 %v1504, %v1510
  %v1513 = vmax.f32 %v1512, 0.0
  %1515 = vrot.lane.b32.xlu0 %v836, 48
  %v1516 = vpop.permute.xlu0 %1515
  %v1518 = vsel %vm324, %v1513, %v1516
  %vm1519 = vcmp.gt.f32.partialorder %v1518, 0.0
  %v1520 = vmin.f32 %v1518, 0.0
  %v1521 = vmul.f32 %v1520, 1.442695
  %v1522 = vpow.pop %v1521
  %v1523 = vsub.f32 %v1522, 1.0
  %v1524 = vsel %vm1519, %v1518, %v1523
  %v1525 = vld [vmem:[%s6] sm:$0xff]
  %v1526 = vld [vmem:[%s6 + $0x8] sm:$0xff]
  %v1527 = vld [vmem:[%s6 + $0x10] sm:$0xff]
  %v1528 = vld [vmem:[%s6 + $0x18] sm:$0xff]
  %v1529 = vld [vmem:[%s6 + $0x20] sm:$0xff]
  %v1530 = vld [vmem:[%s6 + $0x28] sm:$0xff]
  %v1531 = vld [vmem:[%s6 + $0x30] sm:$0xff]
  %v1532 = vld [vmem:[%s6 + $0x38] sm:$0xff]
  %v1533 = vld [vmem:[%s6 + $0x40] sm:$0xff]
  %v1534 = vld [vmem:[%s6 + $0x48] sm:$0xff]
  %v1535 = vld [vmem:[%s6 + $0x50] sm:$0xff]
  %v1536 = vld [vmem:[%s6 + $0x58] sm:$0xff]
  %v1537 = vld [vmem:[%s7] sm:$0x1]
  %v1539 = vlaneseq
  %v1540 = vshrl.u32 %v1539, 7
  %v1541 = vsub.s32 0, %v1540
  %v1542 = vrot.slane %v1537, %v1541
  %v1545 = vsel %vm342, %v1524, 0
  %1547 = vmatprep.subr.mxu0 0.0
  %1548 = vmatpush1.msra.mxu0 %v1525
  %1549 = vmatprep.subr.mxu0 0.0
  %1550 = vmatpush1.msra.mxu0 %v1526
  %1551 = vmatprep.subr.mxu0 0.0
  %1552 = vmatpush1.msra.mxu0 %v1527
  %1553 = vmatprep.subr.mxu0 0.0
  %1554 = vmatpush1.msra.mxu0 %v1528
  %1555 = vmatprep.subr.mxu0 0.0
  %1556 = vmatpush1.msra.mxu0 %v1529
  %1557 = vmatprep.subr.mxu0 0.0
  %1558 = vmatpush1.msra.mxu0 %v1530
  %1559 = vmatprep.subr.mxu0 0.0
  %1560 = vmatpush1.msra.mxu0 %v1531
  %1561 = vmatprep.subr.mxu0 0.0
  %1562 = vmatpush1.msra.mxu0 %v1532
  %1563 = vmatprep.subr.mxu0 0.0
  %1564 = vmatpush1.msra.mxu0 %v1533
  %1565 = vmatprep.subr.mxu0 0.0
  %1566 = vmatpush1.msra.mxu0 %v1534
  %1567 = vmatprep.subr.mxu0 0.0
  %1568 = vmatpush1.msra.mxu0 %v1535
  %1569 = vmatprep.subr.mxu0 0.0
  %1570 = vmatpush1.msra.mxu0 %v1536
  %1571 = vmatprep.subr.mxu0 0.0
  %1572 = vmatpush1.msra.mxu0 0.0
  %1573 = vmatprep.subr.mxu0 0.0
  %1574 = vmatpush1.msra.mxu0 0.0
  %1575 = vmatprep.subr.mxu0 0.0
  %1576 = vmatpush1.msra.mxu0 0.0
  %1577 = vmatprep.subr.mxu0 0.0
  %1578 = vmatpush1.msra.mxu0 0.0
  %1579 = vmatprep.subr.mxu0 0.0
  %1580 = vmatpush1.msra.mxu0 0.0
  %1581 = vmatprep.subr.mxu0 0.0
  %1582 = vmatpush1.msra.mxu0 0.0
  %1583 = vmatprep.subr.mxu0 0.0
  %1584 = vmatpush1.msra.mxu0 0.0
  %1585 = vmatprep.subr.mxu0 0.0
  %1586 = vmatpush1.msra.mxu0 0.0
  %1587 = vmatprep.subr.mxu0 0.0
  %1588 = vmatpush1.msra.mxu0 0.0
  %1589 = vmatprep.subr.mxu0 0.0
  %1590 = vmatpush1.msra.mxu0 0.0
  %1591 = vmatprep.subr.mxu0 0.0
  %1592 = vmatpush1.msra.mxu0 0.0
  %1593 = vmatprep.subr.mxu0 0.0
  %1594 = vmatpush1.msra.mxu0 0.0
  %1595 = vmatprep.subr.mxu0 0.0
  %1596 = vmatpush1.msra.mxu0 0.0
  %1597 = vmatprep.subr.mxu0 0.0
  %1598 = vmatpush1.msra.mxu0 0.0
  %1599 = vmatprep.subr.mxu0 0.0
  %1600 = vmatpush1.msra.mxu0 0.0
  %1601 = vmatprep.subr.mxu0 0.0
  %1602 = vmatpush1.msra.mxu0 0.0
  %1603 = vmatprep.subr.mxu0 0.0
  %1604 = vmatpush1.msra.mxu0 0.0
  %1605 = vmatprep.subr.mxu0 0.0
  %1606 = vmatpush1.msra.mxu0 0.0
  %1607 = vmatprep.subr.mxu0 0.0
  %1608 = vmatpush1.msra.mxu0 0.0
  %1609 = vmatprep.subr.mxu0 0.0
  %1610 = vmatpush1.msra.mxu0 0.0
  %1611 = vmatprep.mubr.f32.mxu0 0.0
  %1612 = vmatmul.mubr.f32.gmra.mrb[0].mxu0 %v1545
  %v1613 = vpop.f32.mrb[0].mxu0
  %v1614 = vadd.f32 %v1542, %v1613
  %v1615 = vpop.f32.mrb[0].mxu0
  %1616 = vdwg.mxu0
  %vm1617 = vcmp.gt.f32.partialorder %v1614, 0.0
  %v1618 = vmin.f32 %v1614, 0.0
  %v1619 = vmul.f32 %v1618, 1.442695
  %v1620 = vpow.pop %v1619
  %v1621 = vsub.f32 %v1620, 1.0
  %v1622 = vsel %vm1617, %v1614, %v1621
  %v1623 = vld [vmem:[%s8] sm:$0x1]
  %v1625 = vlaneseq
  %v1626 = vshrl.u32 %v1625, 7
  %v1627 = vsub.s32 0, %v1626
  %v1628 = vrot.slane %v1623, %v1627
  %v1630 = vmul.f32 %v1622, %v1628
  %vm1631 = vcmask 254976
  %v1632 = vsel %vm1631, %v1630, 0.0
  %1633 = vadd.xlane.f32.xlu0 %v1632
  %v1634 = vpop.xlane.xlu0 %1633
  %v1635 = vld [vmem:[#allocation2] sm:$0x1]
  %v1637 = vlaneseq
  %v1638 = vshrl.u32 %v1637, 7
  %v1639 = vsub.s32 0, %v1638
  %v1640 = vrot.slane %v1635, %v1639
  %v1642 = vadd.f32 %v1634, %v1640
  %v1643 = vxor.u32 %v1642, 2147483648
  %v1644 = vmul.f32 %v1643, 1.442695
  %v1645 = vpow.pop %v1644
  %v1646 = vadd.f32 %v1645, 1.0
  %v1647 = vrcp.pop %v1646
  %v1648 = vmul.f32 1.0, %v1647
  %vm1649 = vcmask 1024
  %1650 = vst.msk [vmem:[%s10] sm:$0x3] %vm1649, %v1648
  // Predicated region
  $region42: #{textcnn_forward.1} parent=0 // pred_check
    _
  $region43: #{textcnn_forward.1} parent=0 // pred_check_branch
    %1652 = sbr.rel (0) target = $region45
  $region44: #{textcnn_forward.1} parent=0 // pred_region
    _
  $region45: #{textcnn_forward.1} parent=0 // pred_fallthru
    _
  // Predicated region
  $region46: #{textcnn_forward.1} parent=0 // pred_check
    _
  $region47: #{textcnn_forward.1} parent=0 // pred_check_branch
    %1654 = sbr.rel (0) target = $region49
  $region48: #{textcnn_forward.1} parent=0 // pred_region
    _
  $region49: #{textcnn_forward.1} parent=0 // pred_fallthru
    _

</llo_original>
